<compile_context>
chip_gen: v5e
topology: v5e:2x2
jax: 0.10.0
libtpu: 0.0.40
codegen_flags: <defaults>
</compile_context>

<pallas_src>
import functools

import jax
import jax.numpy as jnp
import numpy as np
from jax import lax
from jax.experimental import pallas as pl
from jax.experimental.pallas import tpu as pltpu


def _spatial_attention_kernel(H, W, C, x_ref, wband_ref, o_ref):
    """One image per grid step. x_ref: (1, H, W*C); wband_ref: (14*(W+6), W)."""
    x2d = x_ref[0].astype(jnp.float32)                    # (H, W*C), lane-dense

    # Channel mean / max (torch.mean / torch.max over dim=1 of NCHW).
    x3 = x2d.reshape(H, W, C)
    mean_map = jnp.sum(x3, axis=-1) * (1.0 / C)           # (H, W)
    max_map = jnp.max(x3, axis=-1)                        # (H, W)

    # Zero-pad both maps to (H+6, W+6) as *values* (no persistent scratch that
    # needs re-zeroing every iteration).
    zc = jnp.zeros((H, 3), jnp.float32)
    zr = jnp.zeros((3, W + 6), jnp.float32)

    def pad3(m):
        m = jnp.concatenate([zc, m, zc], axis=1)          # (H, W+6)
        return jnp.concatenate([zr, m, zr], axis=0)       # (H+6, W+6)

    pm = pad3(mean_map)
    px = pad3(max_map)

    # Row-offset im2col: A[h, (ky*2+ch)*(W+6) + j] = pad_ch[h+ky, j].
    # 14 static row slices + 1 concat replace 98 per-tap offset reads; the full
    # 7x7x2 conv then becomes a single K = 14*(W+6) MXU matmul.
    blocks = []
    for ky in range(7):
        blocks.append(pm[ky:ky + H, :])
        blocks.append(px[ky:ky + H, :])
    a = jnp.concatenate(blocks, axis=1)                   # (H, 14*(W+6))

    sa = jnp.dot(a, wband_ref[...], preferred_element_type=jnp.float32)  # (H, W)
    gate = jnp.where(sa > 0, sa, 0.1 * sa)                # LeakyReLU(0.1)

    # Broadcast the gate across channels and multiply on the dense (H, W*C)
    # layout -> full-width unmasked stores.
    gate_wide = jnp.broadcast_to(gate[:, :, None], (H, W, C)).reshape(H, W * C)
    o_ref[0] = (x2d * gate_wide).astype(o_ref.dtype)


def _build_band_matrix(wsp, W):
    """Banded weight matrix so the padded 7x7 conv over (mean, max) is one matmul.

    wsp: (7, 7, 2, 1) HWIO conv weight (in-channel 0 = mean map, 1 = max map).
    Returns B of shape (14*(W+6), W) with
      B[(ky*2+ch)*(W+6) + j, w] = wsp[ky, j-w, ch, 0] if 0 <= j-w <= 6 else 0.
    """
    Wp = W + 6
    j = jnp.arange(Wp)[:, None]
    w = jnp.arange(W)[None, :]
    off = j - w
    valid = (off >= 0) & (off <= 6)
    offc = jnp.clip(off, 0, 6)
    blocks = []
    for ky in range(7):
        for ch in range(2):
            taps = wsp[ky, :, ch, 0]                      # (7,)
            blocks.append(jnp.where(valid, taps[offc], 0.0))
    return jnp.concatenate(blocks, axis=0).astype(jnp.float32)


def spatial_attention_forward(x_nchw, wsp):
    N, C, H, W = x_nchw.shape
    # NCHW -> NHWC -> (N, H, W*C): lane-dense last dim (W*C = 128 in the demo).
    x = jnp.transpose(x_nchw, (0, 2, 3, 1)).reshape(N, H, W * C).astype(jnp.float32)
    wband = _build_band_matrix(wsp, W)

    kernel = functools.partial(_spatial_attention_kernel, H, W, C)
    grid_spec = pltpu.PrefetchScalarGridSpec(
        num_scalar_prefetch=0,
        grid=(N,),                                        # batch axis -> both TCs on v7x
        in_specs=[
            pl.BlockSpec((1, H, W * C), lambda n: (n, 0, 0)),
            pl.BlockSpec((14 * (W + 6), W), lambda n: (0, 0)),
        ],
        out_specs=pl.BlockSpec((1, H, W * C), lambda n: (n, 0, 0)),
    )
    out = pl.pallas_call(
        kernel,
        out_shape=jax.ShapeDtypeStruct((N, H, W * C), jnp.float32),
        grid_spec=grid_spec,
        compiler_params=pltpu.CompilerParams(dimension_semantics=("parallel",)),
    )(x, wband)
    # TODO(synk): for large H/W, tile H into row blocks with a 3-row halo and set
    # vmem_limit_bytes explicitly; at this size the whole image fits in VMEM.
    return jnp.transpose(out.reshape(N, H, W, C), (0, 3, 1, 2))


def ref_forward(x_nchw, wsp):
    """Pure-JAX reference matching the PyTorch module semantics."""
    x = jnp.transpose(x_nchw, (0, 2, 3, 1))               # NHWC
    mm = jnp.concatenate([jnp.mean(x, -1, keepdims=True),
                          jnp.max(x, -1, keepdims=True)], axis=-1)
    sa = lax.conv_general_dilated(mm, wsp, (1, 1), [(3, 3), (3, 3)],
                                  dimension_numbers=('NHWC', 'HWIO', 'NHWC'))
    gate = jnp.where(sa > 0, sa, 0.1 * sa)                # LeakyReLU(0.1)
    return jnp.transpose(x * gate, (0, 3, 1, 2))


if __name__ == "__main__":
    key = jax.random.PRNGKey(0)
    kx, kw = jax.random.split(key)
    N, C, H, W = 2, 8, 16, 16          # W*C = 128 -> lane-dense blocks

    x = jax.random.normal(kx, (N, C, H, W), jnp.float32)
    wsp = jax.random.normal(kw, (7, 7, 2, 1), jnp.float32) * (0.3 / np.sqrt(98.0))

    out = spatial_attention_forward(x, wsp)
    out = jax.block_until_ready(out)

    ref = ref_forward(x, wsp)
    max_err = float(jnp.max(jnp.abs(out - ref)))
    assert np.allclose(np.asarray(out), np.asarray(ref), atol=1e-2, rtol=1e-2), max_err

    print("KERNEL_OK")
</pallas_src>

<mosaic_0001>
module attributes {stable_mosaic.version = 11 : i64} {
  func.func @_spatial_attention_kernel(%arg0: i32, %arg1: memref<1x16x128xf32, #tpu.memory_space<vmem>>, %arg2: memref<308x16xf32, #tpu.memory_space<vmem>>, %arg3: memref<1x16x128xf32, #tpu.memory_space<vmem>>) attributes {dimension_semantics = [#tpu.dimension_semantics<parallel>], iteration_bounds = array<i64: 2>, scalar_prefetch = 0 : i64, scratch_operands = 0 : i64, tpu.core_type = #tpu.core_type<tc>, window_params = [{transform_indices = @transform_0, window_bounds = array<i64: 1, 16, 128>}, {pipeline_mode = #tpu.pipeline_mode<synchronous>, transform_indices = @transform_1, window_bounds = array<i64: 308, 16>}, {transform_indices = @transform_2, window_bounds = array<i64: 1, 16, 128>}]} {
    %c0 = arith.constant 0 : index
    %c0_0 = arith.constant 0 : index
    %c0_1 = arith.constant 0 : index
    %0 = vector.load %arg1[%c0, %c0_0, %c0_1] : memref<1x16x128xf32, #tpu.memory_space<vmem>>, vector<1x16x128xf32>
    %1 = vector.shape_cast %0 : vector<1x16x128xf32> to vector<16x128xf32>
    %2 = vector.shape_cast %1 : vector<16x128xf32> to vector<16x16x8xf32>
    %cst = arith.constant dense<0.000000e+00> : vector<16x16xf32>
    %3 = vector.multi_reduction <add>, %2, %cst [2] : vector<16x16x8xf32> to vector<16x16xf32>
    %cst_2 = arith.constant 1.250000e-01 : f32
    %4 = vector.broadcast %cst_2 : f32 to vector<16x16xf32>
    %5 = arith.mulf %3, %4 : vector<16x16xf32>
    %cst_3 = arith.constant dense<0xFF800000> : vector<16x16xf32>
    %6 = vector.multi_reduction <maximumf>, %2, %cst_3 [2] : vector<16x16x8xf32> to vector<16x16xf32>
    %cst_4 = arith.constant 0.000000e+00 : f32
    %7 = vector.broadcast %cst_4 : f32 to vector<16x3xf32>
    %cst_5 = arith.constant 0.000000e+00 : f32
    %8 = vector.broadcast %cst_5 : f32 to vector<3x22xf32>
    %9 = tpu.concatenate %7, %5, %7 in 1 : vector<16x3xf32>, vector<16x16xf32>, vector<16x3xf32> -> vector<16x22xf32>
    %10 = tpu.concatenate %8, %9, %8 in 0 : vector<3x22xf32>, vector<16x22xf32>, vector<3x22xf32> -> vector<22x22xf32>
    %11 = tpu.concatenate %7, %6, %7 in 1 : vector<16x3xf32>, vector<16x16xf32>, vector<16x3xf32> -> vector<16x22xf32>
    %12 = tpu.concatenate %8, %11, %8 in 0 : vector<3x22xf32>, vector<16x22xf32>, vector<3x22xf32> -> vector<22x22xf32>
    %13 = vector.extract_strided_slice %10 {offsets = [0, 0], sizes = [16, 22], strides = [1, 1]} : vector<22x22xf32> to vector<16x22xf32>
    %14 = vector.extract_strided_slice %12 {offsets = [0, 0], sizes = [16, 22], strides = [1, 1]} : vector<22x22xf32> to vector<16x22xf32>
    %15 = vector.extract_strided_slice %10 {offsets = [1, 0], sizes = [16, 22], strides = [1, 1]} : vector<22x22xf32> to vector<16x22xf32>
    %16 = vector.extract_strided_slice %12 {offsets = [1, 0], sizes = [16, 22], strides = [1, 1]} : vector<22x22xf32> to vector<16x22xf32>
    %17 = vector.extract_strided_slice %10 {offsets = [2, 0], sizes = [16, 22], strides = [1, 1]} : vector<22x22xf32> to vector<16x22xf32>
    %18 = vector.extract_strided_slice %12 {offsets = [2, 0], sizes = [16, 22], strides = [1, 1]} : vector<22x22xf32> to vector<16x22xf32>
    %19 = vector.extract_strided_slice %10 {offsets = [3, 0], sizes = [16, 22], strides = [1, 1]} : vector<22x22xf32> to vector<16x22xf32>
    %20 = vector.extract_strided_slice %12 {offsets = [3, 0], sizes = [16, 22], strides = [1, 1]} : vector<22x22xf32> to vector<16x22xf32>
    %21 = vector.extract_strided_slice %10 {offsets = [4, 0], sizes = [16, 22], strides = [1, 1]} : vector<22x22xf32> to vector<16x22xf32>
    %22 = vector.extract_strided_slice %12 {offsets = [4, 0], sizes = [16, 22], strides = [1, 1]} : vector<22x22xf32> to vector<16x22xf32>
    %23 = vector.extract_strided_slice %10 {offsets = [5, 0], sizes = [16, 22], strides = [1, 1]} : vector<22x22xf32> to vector<16x22xf32>
    %24 = vector.extract_strided_slice %12 {offsets = [5, 0], sizes = [16, 22], strides = [1, 1]} : vector<22x22xf32> to vector<16x22xf32>
    %25 = vector.extract_strided_slice %10 {offsets = [6, 0], sizes = [16, 22], strides = [1, 1]} : vector<22x22xf32> to vector<16x22xf32>
    %26 = vector.extract_strided_slice %12 {offsets = [6, 0], sizes = [16, 22], strides = [1, 1]} : vector<22x22xf32> to vector<16x22xf32>
    %27 = tpu.concatenate %13, %14, %15, %16, %17, %18, %19, %20, %21, %22, %23, %24, %25, %26 in 1 : vector<16x22xf32>, vector<16x22xf32>, vector<16x22xf32>, vector<16x22xf32>, vector<16x22xf32>, vector<16x22xf32>, vector<16x22xf32>, vector<16x22xf32>, vector<16x22xf32>, vector<16x22xf32>, vector<16x22xf32>, vector<16x22xf32>, vector<16x22xf32>, vector<16x22xf32> -> vector<16x308xf32>
    %c0_6 = arith.constant 0 : index
    %c0_7 = arith.constant 0 : index
    %28 = vector.load %arg2[%c0_6, %c0_7] : memref<308x16xf32, #tpu.memory_space<vmem>>, vector<308x16xf32>
    %cst_8 = arith.constant dense<0.000000e+00> : vector<16x16xf32>
    %29 = tpu.matmul %27, %28, %cst_8 {dimension_numbers = #tpu.dot_dimension_numbers<[1], [0], [0], [1], [0, 0, 1, 1], [], []>} : vector<16x308xf32>, vector<308x16xf32>, vector<16x16xf32> -> vector<16x16xf32>
    %cst_9 = arith.constant 0.000000e+00 : f32
    %30 = vector.broadcast %cst_9 : f32 to vector<16x16xf32>
    %31 = arith.cmpf ogt, %29, %30 : vector<16x16xf32>
    %cst_10 = arith.constant 1.000000e-01 : f32
    %32 = vector.broadcast %cst_10 : f32 to vector<16x16xf32>
    %33 = arith.mulf %32, %29 : vector<16x16xf32>
    %34 = arith.select %31, %29, %33 : vector<16x16xi1>, vector<16x16xf32>
    %35 = vector.shape_cast %34 : vector<16x16xf32> to vector<16x16x1xf32>
    %36 = vector.shape_cast %35 : vector<16x16x1xf32> to vector<16x16x1xf32>
    %37 = vector.broadcast %36 : vector<16x16x1xf32> to vector<16x16x8xf32>
    %38 = vector.shape_cast %37 : vector<16x16x8xf32> to vector<16x128xf32>
    %39 = arith.mulf %1, %38 : vector<16x128xf32>
    %c0_11 = arith.constant 0 : index
    %c0_12 = arith.constant 0 : index
    %c0_13 = arith.constant 0 : index
    %40 = vector.load %arg3[%c0_11, %c0_12, %c0_13] : memref<1x16x128xf32, #tpu.memory_space<vmem>>, vector<1x16x128xf32>
    %41 = vector.shape_cast %40 : vector<1x16x128xf32> to vector<16x128xf32>
    %42 = vector.shape_cast %39 : vector<16x128xf32> to vector<1x16x128xf32>
    tpu.vector_store %arg3[%c0_11, %c0_12, %c0_13], %42 {strides = array<i32>} : memref<1x16x128xf32, #tpu.memory_space<vmem>>, vector<1x16x128xf32>,
    return
  }
  func.func @transform_0(%arg0: i32) -> (i32, i32, i32) {
    %c0_i32 = arith.constant 0 : i32
    %c0_i32_0 = arith.constant 0 : i32
    %c0_i32_1 = arith.constant 0 : i32
    return %arg0, %c0_i32, %c0_i32_0 : i32, i32, i32
  }
  func.func @transform_1(%arg0: i32) -> (i32, i32) {
    %c0_i32 = arith.constant 0 : i32
    %c0_i32_0 = arith.constant 0 : i32
    %c0_i32_1 = arith.constant 0 : i32
    return %c0_i32, %c0_i32_0 : i32, i32
  }
  func.func @transform_2(%arg0: i32) -> (i32, i32, i32) {
    %c0_i32 = arith.constant 0 : i32
    %c0_i32_0 = arith.constant 0 : i32
    %c0_i32_1 = arith.constant 0 : i32
    return %arg0, %c0_i32, %c0_i32_0 : i32, i32, i32
  }
}

</mosaic_0001>

<llo_original>
// kernel: tpu_custom_call.1
$region0: #{tpu_custom_call.1}
  #allocation0 [shape = 'u32[]', space=smem, size = 0x4, offset = 0x4, fixed_abs, tag = 'smem constant byte address 0x4 - core index']
  #allocation1 [shape = 'u32[72,128]{1,0:T(1,128)}', space=vmem, size = 0x9000, scoped, tag = 'internal scratch']
  %s0 = inlined_call_operand.vmem [shape: f32[2,16,128], index: 0, kind: input, shape index: {}]
  %s1 = inlined_call_operand.vmem [shape: f32[308,16], index: 1, kind: input, shape index: {}]
  %s2 = inlined_call_operand.hbm [shape: f32[2,16,128], index: 2, kind: output, shape index: {}]
  %s3 = sld [smem:[#allocation0]]
  $region41: #{tpu_custom_call.1} parent=0
    _
  %s5 = ssub.s32 1, %s3
  %s6 = scalar_select 0, %s5, %s3
  $region1: #{tpu_custom_call.1} parent=0
    #allocation2 [shape = 'u8[16384]{0}', space=vmem, size = 0x4000, scoped, tag = 'output window, operand 0']
    #allocation3 [shape = 's32[2]{0}', space=sflag, size = 0x8, scoped, tag = 'scoped memory for tpu_custom_call.1']
    %7 = vsyncpa [#allocation3], 0
    %s8 = scalar_lea.sflag [#allocation3], 1
    %9 = vsyncpa %s8, 0
    loop: start=0, step=1, limit=4
    $region2: #{tpu_custom_call.1} parent=1 // loop_pre_header
      _
    $region3: #{tpu_custom_call.1} parent=1 // loop_header
      %s11 = sphi 0, %s15
      %p12 = scmp.ge.s32.totalorder %s11, 4
      %s21 = sphi 0, %s23
      %s24 = sphi 0, %s21
      %s25 = sphi 0, %s24
      %s41 = sphi 0, %s25
      %s45 = sphi 0, %s45
      %s47 = sphi 0, %s45
      %s48 = sphi 0, %s47
      %s62 = sphi 0, %s48
      %s68 = sphi 0, %s70
      %s71 = sphi 0, %s68
      %s72 = sphi 0, %s71
      %s88 = sphi 0, %s72
    $region4: #{tpu_custom_call.1} parent=1 // loop_header_branch
      %14 = sbr.rel (%p12) target = $region8
    $region5: #{tpu_custom_call.1} parent=1 // loop_body
      %s16 = ssub.s32 %s11, 1
      %s17 = ssub.s32 %s11, 2
      %s18 = sadd.s32 %s11, 1
      %s19 = ssub.s32 %s11, %s18
      %p20 = scmp.eq.s32.totalorder %s19, 0
      %s22 = sadd.s32 %s21, 1
      %s23 = scalar_select %p20, %s21, %s22
      %p26 = pneg %p20
      %p27 = scmp.eq.s32.totalorder %s11, 1
      %p28 = por %p26, %p27
      %p29 = scmp.ne.s32.totalorder %s21, %s24
      %p30 = scmp.eq.s32.totalorder %s11, 0
      %p31 = por %p29, %p30
      %p32 = scmp.ne.s32.totalorder %s21, %s24
      %p33 = scmp.eq.s32.totalorder %s16, 1
      %p34 = por %p32, %p33
      %p35 = scmp.ne.s32.totalorder %s24, %s25
      %p36 = scmp.eq.s32.totalorder %s16, 0
      %p37 = por %p35, %p36
      %p38 = scmp.ne.s32.totalorder %s24, %s25
      %p39 = scmp.eq.s32.totalorder %s17, 1
      %p40 = por %p38, %p39
      %p42 = scmp.ne.s32.totalorder %s25, %s41
      %p43 = scmp.eq.s32.totalorder %s17, 0
      %p44 = por %p42, %p43
      %s46 = sadd.s32 %s45, 1
      %p49 = scmp.eq.s32.totalorder %s11, 1
      %p50 = scmp.ne.s32.totalorder %s45, %s47
      %p51 = scmp.eq.s32.totalorder %s11, 0
      %p52 = por %p50, %p51
      %p53 = scmp.ne.s32.totalorder %s45, %s47
      %p54 = scmp.eq.s32.totalorder %s16, 1
      %p55 = por %p53, %p54
      %p56 = scmp.ne.s32.totalorder %s47, %s48
      %p57 = scmp.eq.s32.totalorder %s16, 0
      %p58 = por %p56, %p57
      %p59 = scmp.ne.s32.totalorder %s47, %s48
      %p60 = scmp.eq.s32.totalorder %s17, 1
      %p61 = por %p59, %p60
      %p63 = scmp.ne.s32.totalorder %s48, %s62
      %p64 = scmp.eq.s32.totalorder %s17, 0
      %p65 = por %p63, %p64
      %s66 = ssub.s32 %s11, %s18
      %p67 = scmp.eq.s32.totalorder %s66, 0
      %s69 = sadd.s32 %s68, 1
      %s70 = scalar_select %p67, %s68, %s69
      %p73 = pneg %p67
      %p74 = scmp.eq.s32.totalorder %s11, 1
      %p75 = por %p73, %p74
      %p76 = scmp.ne.s32.totalorder %s68, %s71
      %p77 = scmp.eq.s32.totalorder %s11, 0
      %p78 = por %p76, %p77
      %p79 = scmp.ne.s32.totalorder %s68, %s71
      %p80 = scmp.eq.s32.totalorder %s16, 1
      %p81 = por %p79, %p80
      %p82 = scmp.ne.s32.totalorder %s71, %s72
      %p83 = scmp.eq.s32.totalorder %s16, 0
      %p84 = por %p82, %p83
      %p85 = scmp.ne.s32.totalorder %s71, %s72
      %p86 = scmp.eq.s32.totalorder %s17, 1
      %p87 = por %p85, %p86
      %p89 = scmp.ne.s32.totalorder %s72, %s88
      %p90 = scmp.eq.s32.totalorder %s17, 0
      %p91 = por %p89, %p90
      %p92 = scmp.le.s32.totalorder 1, %s11
      %p93 = scmp.lt.s32.totalorder %s11, 3
      %p94 = pnand %p92, %p93
      %p95 = pneg %p94
      // Predicated region
      $region9: #{tpu_custom_call.1} parent=5 // pred_check
        _
      $region10: #{tpu_custom_call.1} parent=5 // pred_check_branch
        %97 = sbr.rel (%p94) target = $region12
      $region11: #{tpu_custom_call.1} parent=5 // pred_region
        %s98 = ssub.s32 %s11, 1
        // Predicated region
        $region13: #{tpu_custom_call.1} parent=11 // pred_check
          %p99 = pneg %p58
        $region14: #{tpu_custom_call.1} parent=11 // pred_check_branch
          %101 = sbr.rel (%p99) target = $region16
        $region15: #{tpu_custom_call.1} parent=11 // pred_region
          _
        $region16: #{tpu_custom_call.1} parent=11 // pred_fallthru
          _
      $region12: #{tpu_custom_call.1} parent=5 // pred_fallthru
        _
      %p102 = scmp.lt.s32.totalorder %s11, 2
      // Predicated region
      $region17: #{tpu_custom_call.1} parent=5 // pred_check
        %p103 = pneg %p102
      $region18: #{tpu_custom_call.1} parent=5 // pred_check_branch
        %105 = sbr.rel (%p103) target = $region20
      $region19: #{tpu_custom_call.1} parent=5 // pred_region
        // Predicated region
        $region21: #{tpu_custom_call.1} parent=19 // pred_check
          %p106 = pneg %p31
        $region22: #{tpu_custom_call.1} parent=19 // pred_check_branch
          %108 = sbr.rel (%p106) target = $region24
        $region23: #{tpu_custom_call.1} parent=19 // pred_region
          %p109 = scmp.lt.s32.totalorder %s11, 1
          %s110 = scalar_select %p109, %s11, 1
          %s111 = smul.addr %s110, 2
          %s112 = smul.addr %s111, 8
          %s113 = scalar_lea.vmem %s0, %s112
        $region24: #{tpu_custom_call.1} parent=19 // pred_fallthru
          _
      $region20: #{tpu_custom_call.1} parent=5 // pred_fallthru
        _
      %p114 = scmp.le.s32.totalorder 1, %s11
      %p115 = scmp.lt.s32.totalorder %s11, 3
      %p116 = pnand %p114, %p115
      %p117 = pneg %p116
      // Predicated region
      $region25: #{tpu_custom_call.1} parent=5 // pred_check
        _
      $region26: #{tpu_custom_call.1} parent=5 // pred_check_branch
        %119 = sbr.rel (%p116) target = $region28
      $region27: #{tpu_custom_call.1} parent=5 // pred_region
        %s120 = ssub.s32 %s11, 1
        %p121 = scmp.lt.s32.totalorder %s16, 1
        %s122 = scalar_select %p121, %s16, 1
        %s123 = smul.addr %s122, 2
        %s124 = smul.addr %s123, 8
        %s125 = scalar_lea.vmem %s0, %s124
        %p126 = pneg %p37
        %p127 = pneg %p34
        %p128 = pneg %p58
        %p129 = pneg %p55
        %p130 = pneg %p84
        %p131 = pneg %p81
        %s132 = sand.u32 %s71, 1
        %s133 = scalar_lea.sflag [#allocation3], %s132
        %s134 = sand.u32 %s71, 1
        %s135 = smul.addr %s134, 16
        %s136 = scalar_lea.vmem [#allocation2], %s135
        %p137 = scmp.lt.s32.totalorder %s16, 1
        %s138 = scalar_select %p137, %s16, 1
        %s139 = smul.addr %s138, 2
        %s140 = smul.addr %s139, 8
        %s141 = scalar_lea.vmem %s0, %s140
        %v142 = vld [vmem:[%s141] sm:$0xff]
        %v143 = vld [vmem:[%s141 + $0x8] sm:$0xff]
        %146 = vrot.lane.b32.xlu0 %v142, 120
        %v147 = vpop.permute.xlu0 %146
        %148 = vrot.lane.b32.xlu0 %v143, 120
        %v149 = vpop.permute.xlu0 %148
        %152 = vrot.lane.b32.xlu0 %v142, 112
        %v153 = vpop.permute.xlu0 %152
        %154 = vrot.lane.b32.xlu0 %v143, 112
        %v155 = vpop.permute.xlu0 %154
        %158 = vrot.lane.b32.xlu0 %v142, 104
        %v159 = vpop.permute.xlu0 %158
        %160 = vrot.lane.b32.xlu0 %v143, 104
        %v161 = vpop.permute.xlu0 %160
        %164 = vrot.lane.b32.xlu0 %v142, 96
        %v165 = vpop.permute.xlu0 %164
        %166 = vrot.lane.b32.xlu0 %v143, 96
        %v167 = vpop.permute.xlu0 %166
        %170 = vrot.lane.b32.xlu0 %v142, 88
        %v171 = vpop.permute.xlu0 %170
        %172 = vrot.lane.b32.xlu0 %v143, 88
        %v173 = vpop.permute.xlu0 %172
        %176 = vrot.lane.b32.xlu0 %v142, 80
        %v177 = vpop.permute.xlu0 %176
        %178 = vrot.lane.b32.xlu0 %v143, 80
        %v179 = vpop.permute.xlu0 %178
        %182 = vrot.lane.b32.xlu0 %v142, 72
        %v183 = vpop.permute.xlu0 %182
        %184 = vrot.lane.b32.xlu0 %v143, 72
        %v185 = vpop.permute.xlu0 %184
        %188 = vrot.lane.b32.xlu0 %v142, 64
        %v189 = vpop.permute.xlu0 %188
        %190 = vrot.lane.b32.xlu0 %v143, 64
        %v191 = vpop.permute.xlu0 %190
        %194 = vrot.lane.b32.xlu0 %v142, 56
        %v195 = vpop.permute.xlu0 %194
        %196 = vrot.lane.b32.xlu0 %v143, 56
        %v197 = vpop.permute.xlu0 %196
        %200 = vrot.lane.b32.xlu0 %v142, 48
        %v201 = vpop.permute.xlu0 %200
        %202 = vrot.lane.b32.xlu0 %v143, 48
        %v203 = vpop.permute.xlu0 %202
        %206 = vrot.lane.b32.xlu0 %v142, 40
        %v207 = vpop.permute.xlu0 %206
        %208 = vrot.lane.b32.xlu0 %v143, 40
        %v209 = vpop.permute.xlu0 %208
        %212 = vrot.lane.b32.xlu0 %v142, 32
        %v213 = vpop.permute.xlu0 %212
        %214 = vrot.lane.b32.xlu0 %v143, 32
        %v215 = vpop.permute.xlu0 %214
        %218 = vrot.lane.b32.xlu0 %v142, 24
        %v219 = vpop.permute.xlu0 %218
        %220 = vrot.lane.b32.xlu0 %v143, 24
        %v221 = vpop.permute.xlu0 %220
        %224 = vrot.lane.b32.xlu0 %v142, 16
        %v225 = vpop.permute.xlu0 %224
        %226 = vrot.lane.b32.xlu0 %v143, 16
        %v227 = vpop.permute.xlu0 %226
        %230 = vrot.lane.b32.xlu0 %v142, 8
        %v231 = vpop.permute.xlu0 %230
        %232 = vrot.lane.b32.xlu0 %v143, 8
        %v233 = vpop.permute.xlu0 %232
        %v236 = vrot.slane %v153, 4
        %vm237 = vcmask 1047556
        %v238 = vsel %vm237, %v236, %v142
        %v239 = vrot.slane %v142, 4
        %v240 = vsel %vm237, %v153, %v239
        %v242 = vunpack.c.l.s4 1983009808
        %v243 = vunpack.c.0.s8 %v242
        %v244 = vperm.slane %v238, %v243
        %v246 = vunpack.c.l.s4 1983009808
        %v247 = vunpack.c.0.s8 %v246
        %v248 = vperm.slane %v240, %v247
        %v249 = vrot.slane %v159, 4
        %v250 = vsel %vm237, %v249, %v147
        %v251 = vrot.slane %v147, 4
        %v252 = vsel %vm237, %v159, %v251
        %v254 = vunpack.c.l.s4 1983009808
        %v255 = vunpack.c.0.s8 %v254
        %v256 = vperm.slane %v250, %v255
        %v258 = vunpack.c.l.s4 1983009808
        %v259 = vunpack.c.0.s8 %v258
        %v260 = vperm.slane %v252, %v259
        %v261 = vrot.slane %v177, 4
        %v262 = vsel %vm237, %v261, %v165
        %v263 = vrot.slane %v165, 4
        %v264 = vsel %vm237, %v177, %v263
        %v266 = vunpack.c.l.s4 1983009808
        %v267 = vunpack.c.0.s8 %v266
        %v268 = vperm.slane %v262, %v267
        %v270 = vunpack.c.l.s4 1983009808
        %v271 = vunpack.c.0.s8 %v270
        %v272 = vperm.slane %v264, %v271
        %v273 = vrot.slane %v183, 4
        %v274 = vsel %vm237, %v273, %v171
        %v275 = vrot.slane %v171, 4
        %v276 = vsel %vm237, %v183, %v275
        %v278 = vunpack.c.l.s4 1983009808
        %v279 = vunpack.c.0.s8 %v278
        %v280 = vperm.slane %v274, %v279
        %v282 = vunpack.c.l.s4 1983009808
        %v283 = vunpack.c.0.s8 %v282
        %v284 = vperm.slane %v276, %v283
        %v285 = vrot.slane %v256, 4
        %v286 = vsel %vm237, %v285, %v244
        %v287 = vrot.slane %v244, 4
        %v288 = vsel %vm237, %v256, %v287
        %v290 = vunpack.c.l.s4 1934713408
        %v291 = vunpack.c.0.s8 %v290
        %v292 = vperm.slane %v286, %v291
        %v294 = vunpack.c.l.s4 1934713408
        %v295 = vunpack.c.0.s8 %v294
        %v296 = vperm.slane %v288, %v295
        %v297 = vrot.slane %v260, 4
        %v298 = vsel %vm237, %v297, %v248
        %v299 = vrot.slane %v248, 4
        %v300 = vsel %vm237, %v260, %v299
        %v302 = vunpack.c.l.s4 1934713408
        %v303 = vunpack.c.0.s8 %v302
        %v304 = vperm.slane %v298, %v303
        %v306 = vunpack.c.l.s4 1934713408
        %v307 = vunpack.c.0.s8 %v306
        %v308 = vperm.slane %v300, %v307
        %v309 = vrot.slane %v280, 4
        %v310 = vsel %vm237, %v309, %v268
        %v311 = vrot.slane %v268, 4
        %v312 = vsel %vm237, %v280, %v311
        %v314 = vunpack.c.l.s4 1934713408
        %v315 = vunpack.c.0.s8 %v314
        %v316 = vperm.slane %v310, %v315
        %v318 = vunpack.c.l.s4 1934713408
        %v319 = vunpack.c.0.s8 %v318
        %v320 = vperm.slane %v312, %v319
        %v321 = vrot.slane %v284, 4
        %v322 = vsel %vm237, %v321, %v272
        %v323 = vrot.slane %v272, 4
        %v324 = vsel %vm237, %v284, %v323
        %v326 = vunpack.c.l.s4 1934713408
        %v327 = vunpack.c.0.s8 %v326
        %v328 = vperm.slane %v322, %v327
        %v330 = vunpack.c.l.s4 1934713408
        %v331 = vunpack.c.0.s8 %v330
        %v332 = vperm.slane %v324, %v331
        %v333 = vrot.slane %v316, 4
        %v334 = vsel %vm237, %v333, %v292
        %v335 = vrot.slane %v292, 4
        %v336 = vsel %vm237, %v316, %v335
        %v337 = vrot.slane %v320, 4
        %v338 = vsel %vm237, %v337, %v296
        %v339 = vrot.slane %v296, 4
        %v340 = vsel %vm237, %v320, %v339
        %v341 = vrot.slane %v328, 4
        %v342 = vsel %vm237, %v341, %v304
        %v343 = vrot.slane %v304, 4
        %v344 = vsel %vm237, %v328, %v343
        %v345 = vrot.slane %v332, 4
        %v346 = vsel %vm237, %v345, %v308
        %v347 = vrot.slane %v308, 4
        %v348 = vsel %vm237, %v332, %v347
        %v349 = vrot.slane %v201, 4
        %v350 = vsel %vm237, %v349, %v189
        %v351 = vrot.slane %v189, 4
        %v352 = vsel %vm237, %v201, %v351
        %v354 = vunpack.c.l.s4 1983009808
        %v355 = vunpack.c.0.s8 %v354
        %v356 = vperm.slane %v350, %v355
        %v358 = vunpack.c.l.s4 1983009808
        %v359 = vunpack.c.0.s8 %v358
        %v360 = vperm.slane %v352, %v359
        %v361 = vrot.slane %v207, 4
        %v362 = vsel %vm237, %v361, %v195
        %v363 = vrot.slane %v195, 4
        %v364 = vsel %vm237, %v207, %v363
        %v366 = vunpack.c.l.s4 1983009808
        %v367 = vunpack.c.0.s8 %v366
        %v368 = vperm.slane %v362, %v367
        %v370 = vunpack.c.l.s4 1983009808
        %v371 = vunpack.c.0.s8 %v370
        %v372 = vperm.slane %v364, %v371
        %v373 = vrot.slane %v225, 4
        %v374 = vsel %vm237, %v373, %v213
        %v375 = vrot.slane %v213, 4
        %v376 = vsel %vm237, %v225, %v375
        %v378 = vunpack.c.l.s4 1983009808
        %v379 = vunpack.c.0.s8 %v378
        %v380 = vperm.slane %v374, %v379
        %v382 = vunpack.c.l.s4 1983009808
        %v383 = vunpack.c.0.s8 %v382
        %v384 = vperm.slane %v376, %v383
        %v385 = vrot.slane %v231, 4
        %v386 = vsel %vm237, %v385, %v219
        %v387 = vrot.slane %v219, 4
        %v388 = vsel %vm237, %v231, %v387
        %v390 = vunpack.c.l.s4 1983009808
        %v391 = vunpack.c.0.s8 %v390
        %v392 = vperm.slane %v386, %v391
        %v394 = vunpack.c.l.s4 1983009808
        %v395 = vunpack.c.0.s8 %v394
        %v396 = vperm.slane %v388, %v395
        %v397 = vrot.slane %v368, 4
        %v398 = vsel %vm237, %v397, %v356
        %v399 = vrot.slane %v356, 4
        %v400 = vsel %vm237, %v368, %v399
        %v402 = vunpack.c.l.s4 1934713408
        %v403 = vunpack.c.0.s8 %v402
        %v404 = vperm.slane %v398, %v403
        %v406 = vunpack.c.l.s4 1934713408
        %v407 = vunpack.c.0.s8 %v406
        %v408 = vperm.slane %v400, %v407
        %v409 = vrot.slane %v372, 4
        %v410 = vsel %vm237, %v409, %v360
        %v411 = vrot.slane %v360, 4
        %v412 = vsel %vm237, %v372, %v411
        %v414 = vunpack.c.l.s4 1934713408
        %v415 = vunpack.c.0.s8 %v414
        %v416 = vperm.slane %v410, %v415
        %v418 = vunpack.c.l.s4 1934713408
        %v419 = vunpack.c.0.s8 %v418
        %v420 = vperm.slane %v412, %v419
        %v421 = vrot.slane %v392, 4
        %v422 = vsel %vm237, %v421, %v380
        %v423 = vrot.slane %v380, 4
        %v424 = vsel %vm237, %v392, %v423
        %v426 = vunpack.c.l.s4 1934713408
        %v427 = vunpack.c.0.s8 %v426
        %v428 = vperm.slane %v422, %v427
        %v430 = vunpack.c.l.s4 1934713408
        %v431 = vunpack.c.0.s8 %v430
        %v432 = vperm.slane %v424, %v431
        %v433 = vrot.slane %v396, 4
        %v434 = vsel %vm237, %v433, %v384
        %v435 = vrot.slane %v384, 4
        %v436 = vsel %vm237, %v396, %v435
        %v438 = vunpack.c.l.s4 1934713408
        %v439 = vunpack.c.0.s8 %v438
        %v440 = vperm.slane %v434, %v439
        %v442 = vunpack.c.l.s4 1934713408
        %v443 = vunpack.c.0.s8 %v442
        %v444 = vperm.slane %v436, %v443
        %v445 = vrot.slane %v428, 4
        %v446 = vsel %vm237, %v445, %v404
        %v447 = vrot.slane %v404, 4
        %v448 = vsel %vm237, %v428, %v447
        %v449 = vrot.slane %v432, 4
        %v450 = vsel %vm237, %v449, %v408
        %v451 = vrot.slane %v408, 4
        %v452 = vsel %vm237, %v432, %v451
        %v453 = vrot.slane %v440, 4
        %v454 = vsel %vm237, %v453, %v416
        %v455 = vrot.slane %v416, 4
        %v456 = vsel %vm237, %v440, %v455
        %v457 = vrot.slane %v444, 4
        %v458 = vsel %vm237, %v457, %v420
        %v459 = vrot.slane %v420, 4
        %v460 = vsel %vm237, %v444, %v459
        %v461 = vrot.slane %v155, 4
        %v462 = vsel %vm237, %v461, %v143
        %v463 = vrot.slane %v143, 4
        %v464 = vsel %vm237, %v155, %v463
        %v466 = vunpack.c.l.s4 1983009808
        %v467 = vunpack.c.0.s8 %v466
        %v468 = vperm.slane %v462, %v467
        %v470 = vunpack.c.l.s4 1983009808
        %v471 = vunpack.c.0.s8 %v470
        %v472 = vperm.slane %v464, %v471
        %v473 = vrot.slane %v161, 4
        %v474 = vsel %vm237, %v473, %v149
        %v475 = vrot.slane %v149, 4
        %v476 = vsel %vm237, %v161, %v475
        %v478 = vunpack.c.l.s4 1983009808
        %v479 = vunpack.c.0.s8 %v478
        %v480 = vperm.slane %v474, %v479
        %v482 = vunpack.c.l.s4 1983009808
        %v483 = vunpack.c.0.s8 %v482
        %v484 = vperm.slane %v476, %v483
        %v485 = vrot.slane %v179, 4
        %v486 = vsel %vm237, %v485, %v167
        %v487 = vrot.slane %v167, 4
        %v488 = vsel %vm237, %v179, %v487
        %v490 = vunpack.c.l.s4 1983009808
        %v491 = vunpack.c.0.s8 %v490
        %v492 = vperm.slane %v486, %v491
        %v494 = vunpack.c.l.s4 1983009808
        %v495 = vunpack.c.0.s8 %v494
        %v496 = vperm.slane %v488, %v495
        %v497 = vrot.slane %v185, 4
        %v498 = vsel %vm237, %v497, %v173
        %v499 = vrot.slane %v173, 4
        %v500 = vsel %vm237, %v185, %v499
        %v502 = vunpack.c.l.s4 1983009808
        %v503 = vunpack.c.0.s8 %v502
        %v504 = vperm.slane %v498, %v503
        %v506 = vunpack.c.l.s4 1983009808
        %v507 = vunpack.c.0.s8 %v506
        %v508 = vperm.slane %v500, %v507
        %v509 = vrot.slane %v480, 4
        %v510 = vsel %vm237, %v509, %v468
        %v511 = vrot.slane %v468, 4
        %v512 = vsel %vm237, %v480, %v511
        %v514 = vunpack.c.l.s4 1934713408
        %v515 = vunpack.c.0.s8 %v514
        %v516 = vperm.slane %v510, %v515
        %v518 = vunpack.c.l.s4 1934713408
        %v519 = vunpack.c.0.s8 %v518
        %v520 = vperm.slane %v512, %v519
        %v521 = vrot.slane %v484, 4
        %v522 = vsel %vm237, %v521, %v472
        %v523 = vrot.slane %v472, 4
        %v524 = vsel %vm237, %v484, %v523
        %v526 = vunpack.c.l.s4 1934713408
        %v527 = vunpack.c.0.s8 %v526
        %v528 = vperm.slane %v522, %v527
        %v530 = vunpack.c.l.s4 1934713408
        %v531 = vunpack.c.0.s8 %v530
        %v532 = vperm.slane %v524, %v531
        %v533 = vrot.slane %v504, 4
        %v534 = vsel %vm237, %v533, %v492
        %v535 = vrot.slane %v492, 4
        %v536 = vsel %vm237, %v504, %v535
        %v538 = vunpack.c.l.s4 1934713408
        %v539 = vunpack.c.0.s8 %v538
        %v540 = vperm.slane %v534, %v539
        %v542 = vunpack.c.l.s4 1934713408
        %v543 = vunpack.c.0.s8 %v542
        %v544 = vperm.slane %v536, %v543
        %v545 = vrot.slane %v508, 4
        %v546 = vsel %vm237, %v545, %v496
        %v547 = vrot.slane %v496, 4
        %v548 = vsel %vm237, %v508, %v547
        %v550 = vunpack.c.l.s4 1934713408
        %v551 = vunpack.c.0.s8 %v550
        %v552 = vperm.slane %v546, %v551
        %v554 = vunpack.c.l.s4 1934713408
        %v555 = vunpack.c.0.s8 %v554
        %v556 = vperm.slane %v548, %v555
        %v557 = vrot.slane %v540, 4
        %v558 = vsel %vm237, %v557, %v516
        %v559 = vrot.slane %v516, 4
        %v560 = vsel %vm237, %v540, %v559
        %v561 = vrot.slane %v544, 4
        %v562 = vsel %vm237, %v561, %v520
        %v563 = vrot.slane %v520, 4
        %v564 = vsel %vm237, %v544, %v563
        %v565 = vrot.slane %v552, 4
        %v566 = vsel %vm237, %v565, %v528
        %v567 = vrot.slane %v528, 4
        %v568 = vsel %vm237, %v552, %v567
        %v569 = vrot.slane %v556, 4
        %v570 = vsel %vm237, %v569, %v532
        %v571 = vrot.slane %v532, 4
        %v572 = vsel %vm237, %v556, %v571
        %v573 = vrot.slane %v203, 4
        %v574 = vsel %vm237, %v573, %v191
        %v575 = vrot.slane %v191, 4
        %v576 = vsel %vm237, %v203, %v575
        %v578 = vunpack.c.l.s4 1983009808
        %v579 = vunpack.c.0.s8 %v578
        %v580 = vperm.slane %v574, %v579
        %v582 = vunpack.c.l.s4 1983009808
        %v583 = vunpack.c.0.s8 %v582
        %v584 = vperm.slane %v576, %v583
        %v585 = vrot.slane %v209, 4
        %v586 = vsel %vm237, %v585, %v197
        %v587 = vrot.slane %v197, 4
        %v588 = vsel %vm237, %v209, %v587
        %v590 = vunpack.c.l.s4 1983009808
        %v591 = vunpack.c.0.s8 %v590
        %v592 = vperm.slane %v586, %v591
        %v594 = vunpack.c.l.s4 1983009808
        %v595 = vunpack.c.0.s8 %v594
        %v596 = vperm.slane %v588, %v595
        %v597 = vrot.slane %v227, 4
        %v598 = vsel %vm237, %v597, %v215
        %v599 = vrot.slane %v215, 4
        %v600 = vsel %vm237, %v227, %v599
        %v602 = vunpack.c.l.s4 1983009808
        %v603 = vunpack.c.0.s8 %v602
        %v604 = vperm.slane %v598, %v603
        %v606 = vunpack.c.l.s4 1983009808
        %v607 = vunpack.c.0.s8 %v606
        %v608 = vperm.slane %v600, %v607
        %v609 = vrot.slane %v233, 4
        %v610 = vsel %vm237, %v609, %v221
        %v611 = vrot.slane %v221, 4
        %v612 = vsel %vm237, %v233, %v611
        %v614 = vunpack.c.l.s4 1983009808
        %v615 = vunpack.c.0.s8 %v614
        %v616 = vperm.slane %v610, %v615
        %v618 = vunpack.c.l.s4 1983009808
        %v619 = vunpack.c.0.s8 %v618
        %v620 = vperm.slane %v612, %v619
        %v621 = vrot.slane %v592, 4
        %v622 = vsel %vm237, %v621, %v580
        %v623 = vrot.slane %v580, 4
        %v624 = vsel %vm237, %v592, %v623
        %v626 = vunpack.c.l.s4 1934713408
        %v627 = vunpack.c.0.s8 %v626
        %v628 = vperm.slane %v622, %v627
        %v630 = vunpack.c.l.s4 1934713408
        %v631 = vunpack.c.0.s8 %v630
        %v632 = vperm.slane %v624, %v631
        %v633 = vrot.slane %v596, 4
        %v634 = vsel %vm237, %v633, %v584
        %v635 = vrot.slane %v584, 4
        %v636 = vsel %vm237, %v596, %v635
        %v638 = vunpack.c.l.s4 1934713408
        %v639 = vunpack.c.0.s8 %v638
        %v640 = vperm.slane %v634, %v639
        %v642 = vunpack.c.l.s4 1934713408
        %v643 = vunpack.c.0.s8 %v642
        %v644 = vperm.slane %v636, %v643
        %v645 = vrot.slane %v616, 4
        %v646 = vsel %vm237, %v645, %v604
        %v647 = vrot.slane %v604, 4
        %v648 = vsel %vm237, %v616, %v647
        %v650 = vunpack.c.l.s4 1934713408
        %v651 = vunpack.c.0.s8 %v650
        %v652 = vperm.slane %v646, %v651
        %v654 = vunpack.c.l.s4 1934713408
        %v655 = vunpack.c.0.s8 %v654
        %v656 = vperm.slane %v648, %v655
        %v657 = vrot.slane %v620, 4
        %v658 = vsel %vm237, %v657, %v608
        %v659 = vrot.slane %v608, 4
        %v660 = vsel %vm237, %v620, %v659
        %v662 = vunpack.c.l.s4 1934713408
        %v663 = vunpack.c.0.s8 %v662
        %v664 = vperm.slane %v658, %v663
        %v666 = vunpack.c.l.s4 1934713408
        %v667 = vunpack.c.0.s8 %v666
        %v668 = vperm.slane %v660, %v667
        %v669 = vrot.slane %v652, 4
        %v670 = vsel %vm237, %v669, %v628
        %v671 = vrot.slane %v628, 4
        %v672 = vsel %vm237, %v652, %v671
        %v673 = vrot.slane %v656, 4
        %v674 = vsel %vm237, %v673, %v632
        %v675 = vrot.slane %v632, 4
        %v676 = vsel %vm237, %v656, %v675
        %v677 = vrot.slane %v664, 4
        %v678 = vsel %vm237, %v677, %v640
        %v679 = vrot.slane %v640, 4
        %v680 = vsel %vm237, %v664, %v679
        %v681 = vrot.slane %v668, 4
        %v682 = vsel %vm237, %v681, %v644
        %v683 = vrot.slane %v644, 4
        %v684 = vsel %vm237, %v668, %v683
        %vm685 = vcmask 64512
        %v686 = vsel %vm685, %v334, 0.0
        %687 = vadd.xlane.f32.xlu0 %v686
        %v688 = vpop.xlane.xlu0 %687
        %v689 = vsel %vm685, %v446, 0.0
        %690 = vadd.xlane.f32.xlu0 %v689
        %v691 = vpop.xlane.xlu0 %690
        %v692 = vsel %vm685, %v336, 0.0
        %693 = vadd.xlane.f32.xlu0 %v692
        %v694 = vpop.xlane.xlu0 %693
        %v695 = vsel %vm685, %v448, 0.0
        %696 = vadd.xlane.f32.xlu0 %v695
        %v697 = vpop.xlane.xlu0 %696
        %v698 = vsel %vm685, %v338, 0.0
        %699 = vadd.xlane.f32.xlu0 %v698
        %v700 = vpop.xlane.xlu0 %699
        %v701 = vsel %vm685, %v450, 0.0
        %702 = vadd.xlane.f32.xlu0 %v701
        %v703 = vpop.xlane.xlu0 %702
        %v704 = vsel %vm685, %v340, 0.0
        %705 = vadd.xlane.f32.xlu0 %v704
        %v706 = vpop.xlane.xlu0 %705
        %v707 = vsel %vm685, %v452, 0.0
        %708 = vadd.xlane.f32.xlu0 %v707
        %v709 = vpop.xlane.xlu0 %708
        %v710 = vsel %vm685, %v342, 0.0
        %711 = vadd.xlane.f32.xlu0 %v710
        %v712 = vpop.xlane.xlu0 %711
        %v713 = vsel %vm685, %v454, 0.0
        %714 = vadd.xlane.f32.xlu0 %v713
        %v715 = vpop.xlane.xlu0 %714
        %v716 = vsel %vm685, %v344, 0.0
        %717 = vadd.xlane.f32.xlu0 %v716
        %v718 = vpop.xlane.xlu0 %717
        %v719 = vsel %vm685, %v456, 0.0
        %720 = vadd.xlane.f32.xlu0 %v719
        %v721 = vpop.xlane.xlu0 %720
        %v722 = vsel %vm685, %v346, 0.0
        %723 = vadd.xlane.f32.xlu0 %v722
        %v724 = vpop.xlane.xlu0 %723
        %v725 = vsel %vm685, %v458, 0.0
        %726 = vadd.xlane.f32.xlu0 %v725
        %v727 = vpop.xlane.xlu0 %726
        %v728 = vsel %vm685, %v348, 0.0
        %729 = vadd.xlane.f32.xlu0 %v728
        %v730 = vpop.xlane.xlu0 %729
        %v731 = vsel %vm685, %v460, 0.0
        %732 = vadd.xlane.f32.xlu0 %v731
        %v733 = vpop.xlane.xlu0 %732
        %v734 = vsel %vm685, %v558, 0.0
        %735 = vadd.xlane.f32.xlu0 %v734
        %v736 = vpop.xlane.xlu0 %735
        %v737 = vsel %vm685, %v670, 0.0
        %738 = vadd.xlane.f32.xlu0 %v737
        %v739 = vpop.xlane.xlu0 %738
        %v740 = vsel %vm685, %v560, 0.0
        %741 = vadd.xlane.f32.xlu0 %v740
        %v742 = vpop.xlane.xlu0 %741
        %v743 = vsel %vm685, %v672, 0.0
        %744 = vadd.xlane.f32.xlu0 %v743
        %v745 = vpop.xlane.xlu0 %744
        %v746 = vsel %vm685, %v562, 0.0
        %747 = vadd.xlane.f32.xlu0 %v746
        %v748 = vpop.xlane.xlu0 %747
        %v749 = vsel %vm685, %v674, 0.0
        %750 = vadd.xlane.f32.xlu0 %v749
        %v751 = vpop.xlane.xlu0 %750
        %v752 = vsel %vm685, %v564, 0.0
        %753 = vadd.xlane.f32.xlu0 %v752
        %v754 = vpop.xlane.xlu0 %753
        %v755 = vsel %vm685, %v676, 0.0
        %756 = vadd.xlane.f32.xlu0 %v755
        %v757 = vpop.xlane.xlu0 %756
        %v758 = vsel %vm685, %v566, 0.0
        %759 = vadd.xlane.f32.xlu0 %v758
        %v760 = vpop.xlane.xlu0 %759
        %v761 = vsel %vm685, %v678, 0.0
        %762 = vadd.xlane.f32.xlu0 %v761
        %v763 = vpop.xlane.xlu0 %762
        %v764 = vsel %vm685, %v568, 0.0
        %765 = vadd.xlane.f32.xlu0 %v764
        %v766 = vpop.xlane.xlu0 %765
        %v767 = vsel %vm685, %v680, 0.0
        %768 = vadd.xlane.f32.xlu0 %v767
        %v769 = vpop.xlane.xlu0 %768
        %v770 = vsel %vm685, %v570, 0.0
        %771 = vadd.xlane.f32.xlu0 %v770
        %v772 = vpop.xlane.xlu0 %771
        %v773 = vsel %vm685, %v682, 0.0
        %774 = vadd.xlane.f32.xlu0 %v773
        %v775 = vpop.xlane.xlu0 %774
        %v776 = vsel %vm685, %v572, 0.0
        %777 = vadd.xlane.f32.xlu0 %v776
        %v778 = vpop.xlane.xlu0 %777
        %v779 = vsel %vm685, %v684, 0.0
        %780 = vadd.xlane.f32.xlu0 %v779
        %v781 = vpop.xlane.xlu0 %780
        %v782 = vmul.f32 %v688, 0.125
        %v783 = vmul.f32 %v691, 0.125
        %v784 = vmul.f32 %v694, 0.125
        %v785 = vmul.f32 %v697, 0.125
        %v786 = vmul.f32 %v700, 0.125
        %v787 = vmul.f32 %v703, 0.125
        %v788 = vmul.f32 %v706, 0.125
        %v789 = vmul.f32 %v709, 0.125
        %v790 = vmul.f32 %v712, 0.125
        %v791 = vmul.f32 %v715, 0.125
        %v792 = vmul.f32 %v718, 0.125
        %v793 = vmul.f32 %v721, 0.125
        %v794 = vmul.f32 %v724, 0.125
        %v795 = vmul.f32 %v727, 0.125
        %v796 = vmul.f32 %v730, 0.125
        %v797 = vmul.f32 %v733, 0.125
        %v798 = vmul.f32 %v736, 0.125
        %v799 = vmul.f32 %v739, 0.125
        %v800 = vmul.f32 %v742, 0.125
        %v801 = vmul.f32 %v745, 0.125
        %v802 = vmul.f32 %v748, 0.125
        %v803 = vmul.f32 %v751, 0.125
        %v804 = vmul.f32 %v754, 0.125
        %v805 = vmul.f32 %v757, 0.125
        %v806 = vmul.f32 %v760, 0.125
        %v807 = vmul.f32 %v763, 0.125
        %v808 = vmul.f32 %v766, 0.125
        %v809 = vmul.f32 %v769, 0.125
        %v810 = vmul.f32 %v772, 0.125
        %v811 = vmul.f32 %v775, 0.125
        %v812 = vmul.f32 %v778, 0.125
        %v813 = vmul.f32 %v781, 0.125
        %v814 = vsel %vm685, %v334, -inf
        %815 = vmax.xlane.f32.xlu0 %v814
        %v816 = vpop.xlane.xlu0 %815
        %v817 = vsel %vm685, %v446, -inf
        %818 = vmax.xlane.f32.xlu0 %v817
        %v819 = vpop.xlane.xlu0 %818
        %v820 = vsel %vm685, %v336, -inf
        %821 = vmax.xlane.f32.xlu0 %v820
        %v822 = vpop.xlane.xlu0 %821
        %v823 = vsel %vm685, %v448, -inf
        %824 = vmax.xlane.f32.xlu0 %v823
        %v825 = vpop.xlane.xlu0 %824
        %v826 = vsel %vm685, %v338, -inf
        %827 = vmax.xlane.f32.xlu0 %v826
        %v828 = vpop.xlane.xlu0 %827
        %v829 = vsel %vm685, %v450, -inf
        %830 = vmax.xlane.f32.xlu0 %v829
        %v831 = vpop.xlane.xlu0 %830
        %v832 = vsel %vm685, %v340, -inf
        %833 = vmax.xlane.f32.xlu0 %v832
        %v834 = vpop.xlane.xlu0 %833
        %v835 = vsel %vm685, %v452, -inf
        %836 = vmax.xlane.f32.xlu0 %v835
        %v837 = vpop.xlane.xlu0 %836
        %v838 = vsel %vm685, %v342, -inf
        %839 = vmax.xlane.f32.xlu0 %v838
        %v840 = vpop.xlane.xlu0 %839
        %v841 = vsel %vm685, %v454, -inf
        %842 = vmax.xlane.f32.xlu0 %v841
        %v843 = vpop.xlane.xlu0 %842
        %v844 = vsel %vm685, %v344, -inf
        %845 = vmax.xlane.f32.xlu0 %v844
        %v846 = vpop.xlane.xlu0 %845
        %v847 = vsel %vm685, %v456, -inf
        %848 = vmax.xlane.f32.xlu0 %v847
        %v849 = vpop.xlane.xlu0 %848
        %v850 = vsel %vm685, %v346, -inf
        %851 = vmax.xlane.f32.xlu0 %v850
        %v852 = vpop.xlane.xlu0 %851
        %v853 = vsel %vm685, %v458, -inf
        %854 = vmax.xlane.f32.xlu0 %v853
        %v855 = vpop.xlane.xlu0 %854
        %v856 = vsel %vm685, %v348, -inf
        %857 = vmax.xlane.f32.xlu0 %v856
        %v858 = vpop.xlane.xlu0 %857
        %v859 = vsel %vm685, %v460, -inf
        %860 = vmax.xlane.f32.xlu0 %v859
        %v861 = vpop.xlane.xlu0 %860
        %v862 = vsel %vm685, %v558, -inf
        %863 = vmax.xlane.f32.xlu0 %v862
        %v864 = vpop.xlane.xlu0 %863
        %v865 = vsel %vm685, %v670, -inf
        %866 = vmax.xlane.f32.xlu0 %v865
        %v867 = vpop.xlane.xlu0 %866
        %v868 = vsel %vm685, %v560, -inf
        %869 = vmax.xlane.f32.xlu0 %v868
        %v870 = vpop.xlane.xlu0 %869
        %v871 = vsel %vm685, %v672, -inf
        %872 = vmax.xlane.f32.xlu0 %v871
        %v873 = vpop.xlane.xlu0 %872
        %v874 = vsel %vm685, %v562, -inf
        %875 = vmax.xlane.f32.xlu0 %v874
        %v876 = vpop.xlane.xlu0 %875
        %v877 = vsel %vm685, %v674, -inf
        %878 = vmax.xlane.f32.xlu0 %v877
        %v879 = vpop.xlane.xlu0 %878
        %v880 = vsel %vm685, %v564, -inf
        %881 = vmax.xlane.f32.xlu0 %v880
        %v882 = vpop.xlane.xlu0 %881
        %v883 = vsel %vm685, %v676, -inf
        %884 = vmax.xlane.f32.xlu0 %v883
        %v885 = vpop.xlane.xlu0 %884
        %v886 = vsel %vm685, %v566, -inf
        %887 = vmax.xlane.f32.xlu0 %v886
        %v888 = vpop.xlane.xlu0 %887
        %v889 = vsel %vm685, %v678, -inf
        %890 = vmax.xlane.f32.xlu0 %v889
        %v891 = vpop.xlane.xlu0 %890
        %v892 = vsel %vm685, %v568, -inf
        %893 = vmax.xlane.f32.xlu0 %v892
        %v894 = vpop.xlane.xlu0 %893
        %v895 = vsel %vm685, %v680, -inf
        %896 = vmax.xlane.f32.xlu0 %v895
        %v897 = vpop.xlane.xlu0 %896
        %v898 = vsel %vm685, %v570, -inf
        %899 = vmax.xlane.f32.xlu0 %v898
        %v900 = vpop.xlane.xlu0 %899
        %v901 = vsel %vm685, %v682, -inf
        %902 = vmax.xlane.f32.xlu0 %v901
        %v903 = vpop.xlane.xlu0 %902
        %v904 = vsel %vm685, %v572, -inf
        %905 = vmax.xlane.f32.xlu0 %v904
        %v906 = vpop.xlane.xlu0 %905
        %v907 = vsel %vm685, %v684, -inf
        %908 = vmax.xlane.f32.xlu0 %v907
        %v909 = vpop.xlane.xlu0 %908
        %v942 = vlaneseq
        %v943 = vand.u32 %v942, 127
        %v944 = vadd.s32 %v943, 4294967293
        %v945 = vperm.slane %v782, %v944
        %v946 = vadd.s32 %v943, 4294967285
        %v947 = vperm.slane %v783, %v946
        %vm948 = vcmask 154712
        %v949 = vsel %vm948, %v947, %v945
        %v950 = vperm.slane %v784, %v944
        %v951 = vperm.slane %v785, %v946
        %v952 = vsel %vm948, %v951, %v950
        %v953 = vperm.slane %v786, %v944
        %v954 = vperm.slane %v787, %v946
        %v955 = vsel %vm948, %v954, %v953
        %v956 = vperm.slane %v788, %v944
        %v957 = vperm.slane %v789, %v946
        %v958 = vsel %vm948, %v957, %v956
        %v959 = vperm.slane %v790, %v944
        %v960 = vperm.slane %v791, %v946
        %v961 = vsel %vm948, %v960, %v959
        %v962 = vperm.slane %v792, %v944
        %v963 = vperm.slane %v793, %v946
        %v964 = vsel %vm948, %v963, %v962
        %v965 = vperm.slane %v794, %v944
        %v966 = vperm.slane %v795, %v946
        %v967 = vsel %vm948, %v966, %v965
        %v968 = vperm.slane %v796, %v944
        %v969 = vperm.slane %v797, %v946
        %v970 = vsel %vm948, %v969, %v968
        %v971 = vperm.slane %v798, %v944
        %v972 = vperm.slane %v799, %v946
        %v973 = vsel %vm948, %v972, %v971
        %v974 = vperm.slane %v800, %v944
        %v975 = vperm.slane %v801, %v946
        %v976 = vsel %vm948, %v975, %v974
        %v977 = vperm.slane %v802, %v944
        %v978 = vperm.slane %v803, %v946
        %v979 = vsel %vm948, %v978, %v977
        %v980 = vperm.slane %v804, %v944
        %v981 = vperm.slane %v805, %v946
        %v982 = vsel %vm948, %v981, %v980
        %v983 = vperm.slane %v806, %v944
        %v984 = vperm.slane %v807, %v946
        %v985 = vsel %vm948, %v984, %v983
        %v986 = vperm.slane %v808, %v944
        %v987 = vperm.slane %v809, %v946
        %v988 = vsel %vm948, %v987, %v986
        %v989 = vperm.slane %v810, %v944
        %v990 = vperm.slane %v811, %v946
        %v991 = vsel %vm948, %v990, %v989
        %v992 = vperm.slane %v812, %v944
        %v993 = vperm.slane %v813, %v946
        %v994 = vsel %vm948, %v993, %v992
        %vm995 = vcmask 1041409
        %v996 = vsel %vm995, %v952, %v949
        %vm997 = vcmask 1042434
        %v998 = vsel %vm997, %v955, %v996
        %vm999 = vcmask 1043459
        %v1000 = vsel %vm999, %v958, %v998
        %vm1001 = vcmask 1044484
        %v1002 = vsel %vm1001, %v961, %v1000
        %vm1003 = vcmask 1045509
        %v1004 = vsel %vm1003, %v964, %v1002
        %vm1005 = vcmask 1046534
        %v1006 = vsel %vm1005, %v967, %v1004
        %vm1007 = vcmask 1047559
        %v1008 = vsel %vm1007, %v970, %v1006
        %v1009 = vsel %vm995, %v976, %v973
        %v1010 = vsel %vm997, %v979, %v1009
        %v1011 = vsel %vm999, %v982, %v1010
        %v1012 = vsel %vm1001, %v985, %v1011
        %v1013 = vsel %vm1003, %v988, %v1012
        %v1014 = vsel %vm1005, %v991, %v1013
        %v1015 = vsel %vm1007, %v994, %v1014
        %vm1018 = vcmask 23552
        %v1019 = vsel %vm1018, 0.0, %v1008
        %v1020 = vsel %vm1018, 0.0, %v1015
        %vm1021 = vcmask 154624
        %v1022 = vsel %vm1021, %v1019, 0.0
        %v1023 = vsel %vm1021, %v1020, 0.0
        %vm1026 = vcmask 1042432
        %v1027 = vrot.slane %v1022, 5
        %v1028 = vrot.slane %v1023, 5
        %v1029 = vsel %vm1026, %v1027, %v1028
        %v1033 = vsel %vm1026, 0.0, %v1027
        %v1034 = vsel %vm1026, %v1028, 0.0
        %v1067 = vperm.slane %v816, %v944
        %v1068 = vperm.slane %v819, %v946
        %v1069 = vsel %vm948, %v1068, %v1067
        %v1070 = vperm.slane %v822, %v944
        %v1071 = vperm.slane %v825, %v946
        %v1072 = vsel %vm948, %v1071, %v1070
        %v1073 = vperm.slane %v828, %v944
        %v1074 = vperm.slane %v831, %v946
        %v1075 = vsel %vm948, %v1074, %v1073
        %v1076 = vperm.slane %v834, %v944
        %v1077 = vperm.slane %v837, %v946
        %v1078 = vsel %vm948, %v1077, %v1076
        %v1079 = vperm.slane %v840, %v944
        %v1080 = vperm.slane %v843, %v946
        %v1081 = vsel %vm948, %v1080, %v1079
        %v1082 = vperm.slane %v846, %v944
        %v1083 = vperm.slane %v849, %v946
        %v1084 = vsel %vm948, %v1083, %v1082
        %v1085 = vperm.slane %v852, %v944
        %v1086 = vperm.slane %v855, %v946
        %v1087 = vsel %vm948, %v1086, %v1085
        %v1088 = vperm.slane %v858, %v944
        %v1089 = vperm.slane %v861, %v946
        %v1090 = vsel %vm948, %v1089, %v1088
        %v1091 = vperm.slane %v864, %v944
        %v1092 = vperm.slane %v867, %v946
        %v1093 = vsel %vm948, %v1092, %v1091
        %v1094 = vperm.slane %v870, %v944
        %v1095 = vperm.slane %v873, %v946
        %v1096 = vsel %vm948, %v1095, %v1094
        %v1097 = vperm.slane %v876, %v944
        %v1098 = vperm.slane %v879, %v946
        %v1099 = vsel %vm948, %v1098, %v1097
        %v1100 = vperm.slane %v882, %v944
        %v1101 = vperm.slane %v885, %v946
        %v1102 = vsel %vm948, %v1101, %v1100
        %v1103 = vperm.slane %v888, %v944
        %v1104 = vperm.slane %v891, %v946
        %v1105 = vsel %vm948, %v1104, %v1103
        %v1106 = vperm.slane %v894, %v944
        %v1107 = vperm.slane %v897, %v946
        %v1108 = vsel %vm948, %v1107, %v1106
        %v1109 = vperm.slane %v900, %v944
        %v1110 = vperm.slane %v903, %v946
        %v1111 = vsel %vm948, %v1110, %v1109
        %v1112 = vperm.slane %v906, %v944
        %v1113 = vperm.slane %v909, %v946
        %v1114 = vsel %vm948, %v1113, %v1112
        %v1115 = vsel %vm995, %v1072, %v1069
        %v1116 = vsel %vm997, %v1075, %v1115
        %v1117 = vsel %vm999, %v1078, %v1116
        %v1118 = vsel %vm1001, %v1081, %v1117
        %v1119 = vsel %vm1003, %v1084, %v1118
        %v1120 = vsel %vm1005, %v1087, %v1119
        %v1121 = vsel %vm1007, %v1090, %v1120
        %v1122 = vsel %vm995, %v1096, %v1093
        %v1123 = vsel %vm997, %v1099, %v1122
        %v1124 = vsel %vm999, %v1102, %v1123
        %v1125 = vsel %vm1001, %v1105, %v1124
        %v1126 = vsel %vm1003, %v1108, %v1125
        %v1127 = vsel %vm1005, %v1111, %v1126
        %v1128 = vsel %vm1007, %v1114, %v1127
        %v1131 = vsel %vm1018, 0.0, %v1121
        %v1132 = vsel %vm1018, 0.0, %v1128
        %v1133 = vsel %vm1021, %v1131, 0.0
        %v1134 = vsel %vm1021, %v1132, 0.0
        %v1137 = vrot.slane %v1133, 5
        %v1138 = vrot.slane %v1134, 5
        %v1139 = vsel %vm1026, %v1137, %v1138
        %v1142 = vsel %vm1026, 0.0, %v1137
        %v1143 = vsel %vm1026, %v1138, 0.0
        %1145 = vrot.lane.b32.xlu0 %v1142, 22
        %v1146 = vpop.permute.xlu0 %1145
        %1147 = vrot.lane.b32.xlu0 %v1139, 22
        %v1148 = vpop.permute.xlu0 %1147
        %vm1153 = vcmask 1046528
        %v1154 = vrot.slane %v1033, 1
        %v1155 = vrot.slane %v1029, 1
        %v1156 = vsel %vm1153, %v1154, %v1155
        %v1157 = vrot.slane %v1034, 1
        %v1158 = vsel %vm1153, %v1155, %v1157
        %1159 = vrot.lane.b32.xlu0 %v1156, 44
        %v1160 = vpop.permute.xlu0 %1159
        %1161 = vrot.lane.b32.xlu0 %v1158, 44
        %v1162 = vpop.permute.xlu0 %1161
        %v1166 = vrot.slane %v1142, 1
        %v1167 = vrot.slane %v1139, 1
        %v1168 = vsel %vm1153, %v1166, %v1167
        %v1169 = vrot.slane %v1143, 1
        %v1170 = vsel %vm1153, %v1167, %v1169
        %1171 = vrot.lane.b32.xlu0 %v1168, 66
        %v1172 = vpop.permute.xlu0 %1171
        %1173 = vrot.lane.b32.xlu0 %v1170, 66
        %v1174 = vpop.permute.xlu0 %1173
        %vm1177 = vcmask 1045504
        %v1178 = vrot.slane %v1033, 2
        %v1179 = vrot.slane %v1029, 2
        %v1180 = vsel %vm1177, %v1178, %v1179
        %v1181 = vrot.slane %v1034, 2
        %v1182 = vsel %vm1177, %v1179, %v1181
        %1183 = vrot.lane.b32.xlu0 %v1180, 88
        %v1184 = vpop.permute.xlu0 %1183
        %1185 = vrot.lane.b32.xlu0 %v1182, 88
        %v1186 = vpop.permute.xlu0 %1185
        %v1189 = vrot.slane %v1142, 2
        %v1190 = vrot.slane %v1139, 2
        %v1191 = vsel %vm1177, %v1189, %v1190
        %v1192 = vrot.slane %v1143, 2
        %v1193 = vsel %vm1177, %v1190, %v1192
        %1194 = vrot.lane.b32.xlu0 %v1191, 110
        %v1195 = vpop.permute.xlu0 %1194
        %1196 = vrot.lane.b32.xlu0 %v1193, 110
        %v1197 = vpop.permute.xlu0 %1196
        %vm1200 = vcmask 1044480
        %v1201 = vrot.slane %v1033, 3
        %v1202 = vrot.slane %v1029, 3
        %v1203 = vsel %vm1200, %v1201, %v1202
        %v1204 = vrot.slane %v1034, 3
        %v1205 = vsel %vm1200, %v1202, %v1204
        %1206 = vrot.lane.b32.xlu0 %v1203, 4
        %v1207 = vpop.permute.xlu0 %1206
        %1208 = vrot.lane.b32.xlu0 %v1205, 4
        %v1209 = vpop.permute.xlu0 %1208
        %v1212 = vrot.slane %v1142, 3
        %v1213 = vrot.slane %v1139, 3
        %v1214 = vsel %vm1200, %v1212, %v1213
        %v1215 = vrot.slane %v1143, 3
        %v1216 = vsel %vm1200, %v1213, %v1215
        %1217 = vrot.lane.b32.xlu0 %v1214, 26
        %v1218 = vpop.permute.xlu0 %1217
        %1219 = vrot.lane.b32.xlu0 %v1216, 26
        %v1220 = vpop.permute.xlu0 %1219
        %vm1223 = vcmask 1043456
        %v1224 = vrot.slane %v1033, 4
        %v1225 = vrot.slane %v1029, 4
        %v1226 = vsel %vm1223, %v1224, %v1225
        %v1227 = vrot.slane %v1034, 4
        %v1228 = vsel %vm1223, %v1225, %v1227
        %1229 = vrot.lane.b32.xlu0 %v1226, 48
        %v1230 = vpop.permute.xlu0 %1229
        %1231 = vrot.lane.b32.xlu0 %v1228, 48
        %v1232 = vpop.permute.xlu0 %1231
        %v1235 = vrot.slane %v1142, 4
        %v1236 = vrot.slane %v1139, 4
        %v1237 = vsel %vm1223, %v1235, %v1236
        %v1238 = vrot.slane %v1143, 4
        %v1239 = vsel %vm1223, %v1236, %v1238
        %1240 = vrot.lane.b32.xlu0 %v1237, 70
        %v1241 = vpop.permute.xlu0 %1240
        %1242 = vrot.lane.b32.xlu0 %v1239, 70
        %v1243 = vpop.permute.xlu0 %1242
        %v1246 = vrot.slane %v1033, 5
        %v1247 = vrot.slane %v1029, 5
        %v1248 = vsel %vm1026, %v1246, %v1247
        %v1249 = vrot.slane %v1034, 5
        %v1250 = vsel %vm1026, %v1247, %v1249
        %1251 = vrot.lane.b32.xlu0 %v1248, 92
        %v1252 = vpop.permute.xlu0 %1251
        %1253 = vrot.lane.b32.xlu0 %v1250, 92
        %v1254 = vpop.permute.xlu0 %1253
        %v1257 = vrot.slane %v1142, 5
        %v1258 = vrot.slane %v1139, 5
        %v1259 = vsel %vm1026, %v1257, %v1258
        %v1260 = vrot.slane %v1143, 5
        %v1261 = vsel %vm1026, %v1258, %v1260
        %1262 = vrot.lane.b32.xlu0 %v1259, 114
        %v1263 = vpop.permute.xlu0 %1262
        %1264 = vrot.lane.b32.xlu0 %v1261, 114
        %v1265 = vpop.permute.xlu0 %1264
        %vm1268 = vcmask 1041408
        %v1269 = vrot.slane %v1033, 6
        %v1270 = vrot.slane %v1029, 6
        %v1271 = vsel %vm1268, %v1269, %v1270
        %v1272 = vrot.slane %v1034, 6
        %v1273 = vsel %vm1268, %v1270, %v1272
        %1274 = vrot.lane.b32.xlu0 %v1271, 8
        %v1275 = vpop.permute.xlu0 %1274
        %1276 = vrot.lane.b32.xlu0 %v1273, 8
        %v1277 = vpop.permute.xlu0 %1276
        %v1280 = vrot.slane %v1142, 6
        %v1281 = vrot.slane %v1139, 6
        %v1282 = vsel %vm1268, %v1280, %v1281
        %v1283 = vrot.slane %v1143, 6
        %v1284 = vsel %vm1268, %v1281, %v1283
        %1285 = vrot.lane.b32.xlu0 %v1282, 30
        %v1286 = vpop.permute.xlu0 %1285
        %1287 = vrot.lane.b32.xlu0 %v1284, 30
        %v1288 = vpop.permute.xlu0 %1287
        %vm1291 = vcmask 179200
        %v1292 = vsel %vm1291, %v1033, %v1146
        %v1293 = vsel %vm1291, %v1029, %v1148
        %vm1294 = vcmask 359424
        %v1295 = vsel %vm1294, %v1292, %v1160
        %v1296 = vsel %vm1294, %v1293, %v1162
        %vm1297 = vcmask 539648
        %v1298 = vsel %vm1297, %v1295, %v1172
        %v1299 = vsel %vm1297, %v1296, %v1174
        %vm1300 = vcmask 719872
        %v1301 = vsel %vm1300, %v1298, %v1184
        %v1302 = vsel %vm1300, %v1299, %v1186
        %vm1303 = vcmask 900096
        %v1304 = vsel %vm1303, %v1301, %v1195
        %v1305 = vsel %vm1303, %v1302, %v1197
        %vm1306 = vcmask 31744
        %v1307 = vsel %vm1306, %v1195, %v1207
        %v1308 = vsel %vm1306, %v1197, %v1209
        %vm1309 = vcmask 211968
        %v1310 = vsel %vm1309, %v1307, %v1218
        %v1311 = vsel %vm1309, %v1308, %v1220
        %vm1312 = vcmask 392192
        %v1313 = vsel %vm1312, %v1310, %v1230
        %v1314 = vsel %vm1312, %v1311, %v1232
        %vm1315 = vcmask 572416
        %v1316 = vsel %vm1315, %v1313, %v1241
        %v1317 = vsel %vm1315, %v1314, %v1243
        %vm1318 = vcmask 752640
        %v1319 = vsel %vm1318, %v1316, %v1252
        %v1320 = vsel %vm1318, %v1317, %v1254
        %vm1321 = vcmask 932864
        %v1322 = vsel %vm1321, %v1319, %v1263
        %v1323 = vsel %vm1321, %v1320, %v1265
        %v1324 = vsel %vm685, %v1263, %v1275
        %v1325 = vsel %vm685, %v1265, %v1277
        %vm1326 = vcmask 244736
        %v1327 = vsel %vm1326, %v1324, %v1286
        %v1328 = vsel %vm1326, %v1325, %v1288
        %v1329 = vld [vmem:[%s1] sm:$0xff]
        %v1330 = vld [vmem:[%s1 + $0x8] sm:$0xff]
        %v1331 = vld [vmem:[%s1 + $0x10] sm:$0xff]
        %v1332 = vld [vmem:[%s1 + $0x18] sm:$0xff]
        %v1333 = vld [vmem:[%s1 + $0x20] sm:$0xff]
        %v1334 = vld [vmem:[%s1 + $0x28] sm:$0xff]
        %v1335 = vld [vmem:[%s1 + $0x30] sm:$0xff]
        %v1336 = vld [vmem:[%s1 + $0x38] sm:$0xff]
        %v1337 = vld [vmem:[%s1 + $0x40] sm:$0xff]
        %v1338 = vld [vmem:[%s1 + $0x48] sm:$0xff]
        %v1339 = vld [vmem:[%s1 + $0x50] sm:$0xff]
        %v1340 = vld [vmem:[%s1 + $0x58] sm:$0xff]
        %v1341 = vld [vmem:[%s1 + $0x60] sm:$0xff]
        %v1342 = vld [vmem:[%s1 + $0x68] sm:$0xff]
        %v1343 = vld [vmem:[%s1 + $0x70] sm:$0xff]
        %v1344 = vld [vmem:[%s1 + $0x78] sm:$0xff]
        %v1345 = vld [vmem:[%s1 + $0x80] sm:$0xff]
        %v1346 = vld [vmem:[%s1 + $0x88] sm:$0xff]
        %v1347 = vld [vmem:[%s1 + $0x90] sm:$0xff]
        %v1348 = vld [vmem:[%s1 + $0x98] sm:$0xff]
        %v1349 = vld [vmem:[%s1 + $0xa0] sm:$0xff]
        %v1350 = vld [vmem:[%s1 + $0xa8] sm:$0xff]
        %v1351 = vld [vmem:[%s1 + $0xb0] sm:$0xff]
        %v1352 = vld [vmem:[%s1 + $0xb8] sm:$0xff]
        %v1353 = vld [vmem:[%s1 + $0xc0] sm:$0xff]
        %v1354 = vld [vmem:[%s1 + $0xc8] sm:$0xff]
        %v1355 = vld [vmem:[%s1 + $0xd0] sm:$0xff]
        %v1356 = vld [vmem:[%s1 + $0xd8] sm:$0xff]
        %v1357 = vld [vmem:[%s1 + $0xe0] sm:$0xff]
        %v1358 = vld [vmem:[%s1 + $0xe8] sm:$0xff]
        %v1359 = vld [vmem:[%s1 + $0xf0] sm:$0xff]
        %v1360 = vld [vmem:[%s1 + $0xf8] sm:$0xff]
        %v1361 = vld [vmem:[%s1 + $0x100] sm:$0xff]
        %v1362 = vld [vmem:[%s1 + $0x108] sm:$0xff]
        %v1363 = vld [vmem:[%s1 + $0x110] sm:$0xff]
        %v1364 = vld [vmem:[%s1 + $0x118] sm:$0xff]
        %v1365 = vld [vmem:[%s1 + $0x120] sm:$0xff]
        %v1366 = vld [vmem:[%s1 + $0x128] sm:$0xff]
        %v1367 = vld [vmem:[%s1 + $0x130] sm:$0xf]
        %vm1368 = vcmask 424960
        %v1370 = vsel %vm1368, %v1327, 0
        %v1373 = vsel %vm1368, %v1328, 0
        %v1376 = vsel %vm1223, %v1367, 0
        %1378 = vmatpush.msra.mxu0 %v1344
        %1379 = vmatpush.msra.mxu0 %v1343
        %1380 = vmatpush.msra.mxu0 %v1342
        %1381 = vmatpush.msra.mxu0 %v1341
        %1382 = vmatpush.msra.mxu0 %v1340
        %1383 = vmatpush.msra.mxu0 %v1339
        %1384 = vmatpush.msra.mxu0 %v1338
        %1385 = vmatpush.msra.mxu0 %v1337
        %1386 = vmatpush.msra.mxu0 %v1336
        %1387 = vmatpush.msra.mxu0 %v1335
        %1388 = vmatpush.msra.mxu0 %v1334
        %1389 = vmatpush.msra.mxu0 %v1333
        %1390 = vmatpush.msra.mxu0 %v1332
        %1391 = vmatpush.msra.mxu0 %v1331
        %1392 = vmatpush.msra.mxu0 %v1330
        %1393 = vmatpush.msra.mxu0 %v1329
        %1394 = vmatmul.f32.gmra.mxu0 %v1304
        %v1395 = vpop.f32.mrf.mxu0
        %v1396 = vadd.f32 0.0, %v1395
        %1397 = vmatmul.f32.gmra.mxu0 %v1305
        %v1398 = vpop.f32.mrf.mxu0
        %v1399 = vadd.f32 0.0, %v1398
        %1400 = vdwg.mxu0
        %1401 = vmatpush.msra.mxu0 %v1360
        %1402 = vmatpush.msra.mxu0 %v1359
        %1403 = vmatpush.msra.mxu0 %v1358
        %1404 = vmatpush.msra.mxu0 %v1357
        %1405 = vmatpush.msra.mxu0 %v1356
        %1406 = vmatpush.msra.mxu0 %v1355
        %1407 = vmatpush.msra.mxu0 %v1354
        %1408 = vmatpush.msra.mxu0 %v1353
        %1409 = vmatpush.msra.mxu0 %v1352
        %1410 = vmatpush.msra.mxu0 %v1351
        %1411 = vmatpush.msra.mxu0 %v1350
        %1412 = vmatpush.msra.mxu0 %v1349
        %1413 = vmatpush.msra.mxu0 %v1348
        %1414 = vmatpush.msra.mxu0 %v1347
        %1415 = vmatpush.msra.mxu0 %v1346
        %1416 = vmatpush.msra.mxu0 %v1345
        %1417 = vmatmul.f32.gmra.mxu0 %v1322
        %v1418 = vpop.f32.mrf.mxu0
        %v1419 = vadd.f32 %v1396, %v1418
        %1420 = vmatmul.f32.gmra.mxu0 %v1323
        %v1421 = vpop.f32.mrf.mxu0
        %v1422 = vadd.f32 %v1399, %v1421
        %1423 = vdwg.mxu0
        %1424 = vmatpush.msra.mxu0 0.0
        %1425 = vmatpush.msra.mxu0 0.0
        %1426 = vmatpush.msra.mxu0 0.0
        %1427 = vmatpush.msra.mxu0 0.0
        %1428 = vmatpush.msra.mxu0 0.0
        %1429 = vmatpush.msra.mxu0 0.0
        %1430 = vmatpush.msra.mxu0 0.0
        %1431 = vmatpush.msra.mxu0 0.0
        %1432 = vmatpush.msra.mxu0 0.0
        %1433 = vmatpush.msra.mxu0 %v1376
        %1434 = vmatpush.msra.mxu0 %v1366
        %1435 = vmatpush.msra.mxu0 %v1365
        %1436 = vmatpush.msra.mxu0 %v1364
        %1437 = vmatpush.msra.mxu0 %v1363
        %1438 = vmatpush.msra.mxu0 %v1362
        %1439 = vmatpush.msra.mxu0 %v1361
        %1440 = vmatmul.f32.gmra.mxu0 %v1370
        %v1441 = vpop.f32.mrf.mxu0
        %v1442 = vadd.f32 %v1419, %v1441
        %1443 = vmatmul.f32.gmra.mxu0 %v1373
        %v1444 = vpop.f32.mrf.mxu0
        %v1445 = vadd.f32 %v1422, %v1444
        %1446 = vdwg.mxu0
        %vm1447 = vcmp.gt.f32.partialorder %v1442, 0.0
        %vm1448 = vcmp.gt.f32.partialorder %v1445, 0.0
        %v1449 = vmul.f32 %v1442, 0.1
        %v1450 = vmul.f32 %v1445, 0.1
        %v1451 = vsel %vm1447, %v1442, %v1449
        %v1452 = vsel %vm1448, %v1445, %v1450
        %v1453 = vperm.slane %v1451, 0
        %v1454 = vlaneseq
        %v1455 = vshrl.u32 %v1454, 7
        %1457 = vset.pattern.permute.xlu0 %v1455
        %1458 = vperm.xlu0 %1457, %v1453
        %v1459 = vpop.permute.xlu0 %1458
        %v1460 = vlaneseq
        %v1461 = vshrl.u32 %v1460, 7
        %v1462 = vadd.s32 %v1461, 8
        %1463 = vset.pattern.permute.xlu0 %v1462
        %1464 = vperm.xlu0 %1463, %v1453
        %v1465 = vpop.permute.xlu0 %1464
        %v1466 = vperm.slane %v1451, 1
        %v1467 = vlaneseq
        %v1468 = vshrl.u32 %v1467, 7
        %1470 = vset.pattern.permute.xlu0 %v1468
        %1471 = vperm.xlu0 %1470, %v1466
        %v1472 = vpop.permute.xlu0 %1471
        %v1473 = vlaneseq
        %v1474 = vshrl.u32 %v1473, 7
        %v1475 = vadd.s32 %v1474, 8
        %1476 = vset.pattern.permute.xlu0 %v1475
        %1477 = vperm.xlu0 %1476, %v1466
        %v1478 = vpop.permute.xlu0 %1477
        %v1479 = vperm.slane %v1451, 2
        %v1480 = vlaneseq
        %v1481 = vshrl.u32 %v1480, 7
        %1483 = vset.pattern.permute.xlu0 %v1481
        %1484 = vperm.xlu0 %1483, %v1479
        %v1485 = vpop.permute.xlu0 %1484
        %v1486 = vlaneseq
        %v1487 = vshrl.u32 %v1486, 7
        %v1488 = vadd.s32 %v1487, 8
        %1489 = vset.pattern.permute.xlu0 %v1488
        %1490 = vperm.xlu0 %1489, %v1479
        %v1491 = vpop.permute.xlu0 %1490
        %v1492 = vperm.slane %v1451, 3
        %v1493 = vlaneseq
        %v1494 = vshrl.u32 %v1493, 7
        %1496 = vset.pattern.permute.xlu0 %v1494
        %1497 = vperm.xlu0 %1496, %v1492
        %v1498 = vpop.permute.xlu0 %1497
        %v1499 = vlaneseq
        %v1500 = vshrl.u32 %v1499, 7
        %v1501 = vadd.s32 %v1500, 8
        %1502 = vset.pattern.permute.xlu0 %v1501
        %1503 = vperm.xlu0 %1502, %v1492
        %v1504 = vpop.permute.xlu0 %1503
        %v1505 = vperm.slane %v1451, 4
        %v1506 = vlaneseq
        %v1507 = vshrl.u32 %v1506, 7
        %1509 = vset.pattern.permute.xlu0 %v1507
        %1510 = vperm.xlu0 %1509, %v1505
        %v1511 = vpop.permute.xlu0 %1510
        %v1512 = vlaneseq
        %v1513 = vshrl.u32 %v1512, 7
        %v1514 = vadd.s32 %v1513, 8
        %1515 = vset.pattern.permute.xlu0 %v1514
        %1516 = vperm.xlu0 %1515, %v1505
        %v1517 = vpop.permute.xlu0 %1516
        %v1518 = vperm.slane %v1451, 5
        %v1519 = vlaneseq
        %v1520 = vshrl.u32 %v1519, 7
        %1522 = vset.pattern.permute.xlu0 %v1520
        %1523 = vperm.xlu0 %1522, %v1518
        %v1524 = vpop.permute.xlu0 %1523
        %v1525 = vlaneseq
        %v1526 = vshrl.u32 %v1525, 7
        %v1527 = vadd.s32 %v1526, 8
        %1528 = vset.pattern.permute.xlu0 %v1527
        %1529 = vperm.xlu0 %1528, %v1518
        %v1530 = vpop.permute.xlu0 %1529
        %v1531 = vperm.slane %v1451, 6
        %v1532 = vlaneseq
        %v1533 = vshrl.u32 %v1532, 7
        %1535 = vset.pattern.permute.xlu0 %v1533
        %1536 = vperm.xlu0 %1535, %v1531
        %v1537 = vpop.permute.xlu0 %1536
        %v1538 = vlaneseq
        %v1539 = vshrl.u32 %v1538, 7
        %v1540 = vadd.s32 %v1539, 8
        %1541 = vset.pattern.permute.xlu0 %v1540
        %1542 = vperm.xlu0 %1541, %v1531
        %v1543 = vpop.permute.xlu0 %1542
        %v1544 = vperm.slane %v1451, 7
        %v1545 = vlaneseq
        %v1546 = vshrl.u32 %v1545, 7
        %1548 = vset.pattern.permute.xlu0 %v1546
        %1549 = vperm.xlu0 %1548, %v1544
        %v1550 = vpop.permute.xlu0 %1549
        %v1551 = vlaneseq
        %v1552 = vshrl.u32 %v1551, 7
        %v1553 = vadd.s32 %v1552, 8
        %1554 = vset.pattern.permute.xlu0 %v1553
        %1555 = vperm.xlu0 %1554, %v1544
        %v1556 = vpop.permute.xlu0 %1555
        %v1557 = vperm.slane %v1452, 0
        %v1558 = vlaneseq
        %v1559 = vshrl.u32 %v1558, 7
        %1561 = vset.pattern.permute.xlu0 %v1559
        %1562 = vperm.xlu0 %1561, %v1557
        %v1563 = vpop.permute.xlu0 %1562
        %v1564 = vlaneseq
        %v1565 = vshrl.u32 %v1564, 7
        %v1566 = vadd.s32 %v1565, 8
        %1567 = vset.pattern.permute.xlu0 %v1566
        %1568 = vperm.xlu0 %1567, %v1557
        %v1569 = vpop.permute.xlu0 %1568
        %v1570 = vperm.slane %v1452, 1
        %v1571 = vlaneseq
        %v1572 = vshrl.u32 %v1571, 7
        %1574 = vset.pattern.permute.xlu0 %v1572
        %1575 = vperm.xlu0 %1574, %v1570
        %v1576 = vpop.permute.xlu0 %1575
        %v1577 = vlaneseq
        %v1578 = vshrl.u32 %v1577, 7
        %v1579 = vadd.s32 %v1578, 8
        %1580 = vset.pattern.permute.xlu0 %v1579
        %1581 = vperm.xlu0 %1580, %v1570
        %v1582 = vpop.permute.xlu0 %1581
        %v1583 = vperm.slane %v1452, 2
        %v1584 = vlaneseq
        %v1585 = vshrl.u32 %v1584, 7
        %1587 = vset.pattern.permute.xlu0 %v1585
        %1588 = vperm.xlu0 %1587, %v1583
        %v1589 = vpop.permute.xlu0 %1588
        %v1590 = vlaneseq
        %v1591 = vshrl.u32 %v1590, 7
        %v1592 = vadd.s32 %v1591, 8
        %1593 = vset.pattern.permute.xlu0 %v1592
        %1594 = vperm.xlu0 %1593, %v1583
        %v1595 = vpop.permute.xlu0 %1594
        %v1596 = vperm.slane %v1452, 3
        %v1597 = vlaneseq
        %v1598 = vshrl.u32 %v1597, 7
        %1600 = vset.pattern.permute.xlu0 %v1598
        %1601 = vperm.xlu0 %1600, %v1596
        %v1602 = vpop.permute.xlu0 %1601
        %v1603 = vlaneseq
        %v1604 = vshrl.u32 %v1603, 7
        %v1605 = vadd.s32 %v1604, 8
        %1606 = vset.pattern.permute.xlu0 %v1605
        %1607 = vperm.xlu0 %1606, %v1596
        %v1608 = vpop.permute.xlu0 %1607
        %v1609 = vperm.slane %v1452, 4
        %v1610 = vlaneseq
        %v1611 = vshrl.u32 %v1610, 7
        %1613 = vset.pattern.permute.xlu0 %v1611
        %1614 = vperm.xlu0 %1613, %v1609
        %v1615 = vpop.permute.xlu0 %1614
        %v1616 = vlaneseq
        %v1617 = vshrl.u32 %v1616, 7
        %v1618 = vadd.s32 %v1617, 8
        %1619 = vset.pattern.permute.xlu0 %v1618
        %1620 = vperm.xlu0 %1619, %v1609
        %v1621 = vpop.permute.xlu0 %1620
        %v1622 = vperm.slane %v1452, 5
        %v1623 = vlaneseq
        %v1624 = vshrl.u32 %v1623, 7
        %1626 = vset.pattern.permute.xlu0 %v1624
        %1627 = vperm.xlu0 %1626, %v1622
        %v1628 = vpop.permute.xlu0 %1627
        %v1629 = vlaneseq
        %v1630 = vshrl.u32 %v1629, 7
        %v1631 = vadd.s32 %v1630, 8
        %1632 = vset.pattern.permute.xlu0 %v1631
        %1633 = vperm.xlu0 %1632, %v1622
        %v1634 = vpop.permute.xlu0 %1633
        %v1635 = vperm.slane %v1452, 6
        %v1636 = vlaneseq
        %v1637 = vshrl.u32 %v1636, 7
        %1639 = vset.pattern.permute.xlu0 %v1637
        %1640 = vperm.xlu0 %1639, %v1635
        %v1641 = vpop.permute.xlu0 %1640
        %v1642 = vlaneseq
        %v1643 = vshrl.u32 %v1642, 7
        %v1644 = vadd.s32 %v1643, 8
        %1645 = vset.pattern.permute.xlu0 %v1644
        %1646 = vperm.xlu0 %1645, %v1635
        %v1647 = vpop.permute.xlu0 %1646
        %v1648 = vperm.slane %v1452, 7
        %v1649 = vlaneseq
        %v1650 = vshrl.u32 %v1649, 7
        %1652 = vset.pattern.permute.xlu0 %v1650
        %1653 = vperm.xlu0 %1652, %v1648
        %v1654 = vpop.permute.xlu0 %1653
        %v1655 = vlaneseq
        %v1656 = vshrl.u32 %v1655, 7
        %v1657 = vadd.s32 %v1656, 8
        %1658 = vset.pattern.permute.xlu0 %v1657
        %1659 = vperm.xlu0 %1658, %v1648
        %v1660 = vpop.permute.xlu0 %1659
        %v1661 = vrot.slane %v1485, 4
        %v1662 = vsel %vm237, %v1661, %v1459
        %v1663 = vrot.slane %v1459, 4
        %v1664 = vsel %vm237, %v1485, %v1663
        %v1666 = vunpack.c.l.s4 1983009808
        %v1667 = vunpack.c.0.s8 %v1666
        %v1668 = vperm.slane %v1662, %v1667
        %v1670 = vunpack.c.l.s4 1983009808
        %v1671 = vunpack.c.0.s8 %v1670
        %v1672 = vperm.slane %v1664, %v1671
        %v1673 = vrot.slane %v1498, 4
        %v1674 = vsel %vm237, %v1673, %v1472
        %v1675 = vrot.slane %v1472, 4
        %v1676 = vsel %vm237, %v1498, %v1675
        %v1678 = vunpack.c.l.s4 1983009808
        %v1679 = vunpack.c.0.s8 %v1678
        %v1680 = vperm.slane %v1674, %v1679
        %v1682 = vunpack.c.l.s4 1983009808
        %v1683 = vunpack.c.0.s8 %v1682
        %v1684 = vperm.slane %v1676, %v1683
        %v1685 = vrot.slane %v1537, 4
        %v1686 = vsel %vm237, %v1685, %v1511
        %v1687 = vrot.slane %v1511, 4
        %v1688 = vsel %vm237, %v1537, %v1687
        %v1690 = vunpack.c.l.s4 1983009808
        %v1691 = vunpack.c.0.s8 %v1690
        %v1692 = vperm.slane %v1686, %v1691
        %v1694 = vunpack.c.l.s4 1983009808
        %v1695 = vunpack.c.0.s8 %v1694
        %v1696 = vperm.slane %v1688, %v1695
        %v1697 = vrot.slane %v1550, 4
        %v1698 = vsel %vm237, %v1697, %v1524
        %v1699 = vrot.slane %v1524, 4
        %v1700 = vsel %vm237, %v1550, %v1699
        %v1702 = vunpack.c.l.s4 1983009808
        %v1703 = vunpack.c.0.s8 %v1702
        %v1704 = vperm.slane %v1698, %v1703
        %v1706 = vunpack.c.l.s4 1983009808
        %v1707 = vunpack.c.0.s8 %v1706
        %v1708 = vperm.slane %v1700, %v1707
        %v1709 = vrot.slane %v1680, 4
        %v1710 = vsel %vm237, %v1709, %v1668
        %v1711 = vrot.slane %v1668, 4
        %v1712 = vsel %vm237, %v1680, %v1711
        %v1714 = vunpack.c.l.s4 1934713408
        %v1715 = vunpack.c.0.s8 %v1714
        %v1716 = vperm.slane %v1710, %v1715
        %v1718 = vunpack.c.l.s4 1934713408
        %v1719 = vunpack.c.0.s8 %v1718
        %v1720 = vperm.slane %v1712, %v1719
        %v1721 = vrot.slane %v1684, 4
        %v1722 = vsel %vm237, %v1721, %v1672
        %v1723 = vrot.slane %v1672, 4
        %v1724 = vsel %vm237, %v1684, %v1723
        %v1726 = vunpack.c.l.s4 1934713408
        %v1727 = vunpack.c.0.s8 %v1726
        %v1728 = vperm.slane %v1722, %v1727
        %v1730 = vunpack.c.l.s4 1934713408
        %v1731 = vunpack.c.0.s8 %v1730
        %v1732 = vperm.slane %v1724, %v1731
        %v1733 = vrot.slane %v1704, 4
        %v1734 = vsel %vm237, %v1733, %v1692
        %v1735 = vrot.slane %v1692, 4
        %v1736 = vsel %vm237, %v1704, %v1735
        %v1738 = vunpack.c.l.s4 1934713408
        %v1739 = vunpack.c.0.s8 %v1738
        %v1740 = vperm.slane %v1734, %v1739
        %v1742 = vunpack.c.l.s4 1934713408
        %v1743 = vunpack.c.0.s8 %v1742
        %v1744 = vperm.slane %v1736, %v1743
        %v1745 = vrot.slane %v1708, 4
        %v1746 = vsel %vm237, %v1745, %v1696
        %v1747 = vrot.slane %v1696, 4
        %v1748 = vsel %vm237, %v1708, %v1747
        %v1750 = vunpack.c.l.s4 1934713408
        %v1751 = vunpack.c.0.s8 %v1750
        %v1752 = vperm.slane %v1746, %v1751
        %v1754 = vunpack.c.l.s4 1934713408
        %v1755 = vunpack.c.0.s8 %v1754
        %v1756 = vperm.slane %v1748, %v1755
        %v1757 = vrot.slane %v1740, 4
        %v1758 = vsel %vm237, %v1757, %v1716
        %v1759 = vrot.slane %v1716, 4
        %v1760 = vsel %vm237, %v1740, %v1759
        %v1761 = vrot.slane %v1744, 4
        %v1762 = vsel %vm237, %v1761, %v1720
        %v1763 = vrot.slane %v1720, 4
        %v1764 = vsel %vm237, %v1744, %v1763
        %v1765 = vrot.slane %v1752, 4
        %v1766 = vsel %vm237, %v1765, %v1728
        %v1767 = vrot.slane %v1728, 4
        %v1768 = vsel %vm237, %v1752, %v1767
        %v1769 = vrot.slane %v1756, 4
        %v1770 = vsel %vm237, %v1769, %v1732
        %v1771 = vrot.slane %v1732, 4
        %v1772 = vsel %vm237, %v1756, %v1771
        %v1773 = vrot.slane %v1589, 4
        %v1774 = vsel %vm237, %v1773, %v1563
        %v1775 = vrot.slane %v1563, 4
        %v1776 = vsel %vm237, %v1589, %v1775
        %v1778 = vunpack.c.l.s4 1983009808
        %v1779 = vunpack.c.0.s8 %v1778
        %v1780 = vperm.slane %v1774, %v1779
        %v1782 = vunpack.c.l.s4 1983009808
        %v1783 = vunpack.c.0.s8 %v1782
        %v1784 = vperm.slane %v1776, %v1783
        %v1785 = vrot.slane %v1602, 4
        %v1786 = vsel %vm237, %v1785, %v1576
        %v1787 = vrot.slane %v1576, 4
        %v1788 = vsel %vm237, %v1602, %v1787
        %v1790 = vunpack.c.l.s4 1983009808
        %v1791 = vunpack.c.0.s8 %v1790
        %v1792 = vperm.slane %v1786, %v1791
        %v1794 = vunpack.c.l.s4 1983009808
        %v1795 = vunpack.c.0.s8 %v1794
        %v1796 = vperm.slane %v1788, %v1795
        %v1797 = vrot.slane %v1641, 4
        %v1798 = vsel %vm237, %v1797, %v1615
        %v1799 = vrot.slane %v1615, 4
        %v1800 = vsel %vm237, %v1641, %v1799
        %v1802 = vunpack.c.l.s4 1983009808
        %v1803 = vunpack.c.0.s8 %v1802
        %v1804 = vperm.slane %v1798, %v1803
        %v1806 = vunpack.c.l.s4 1983009808
        %v1807 = vunpack.c.0.s8 %v1806
        %v1808 = vperm.slane %v1800, %v1807
        %v1809 = vrot.slane %v1654, 4
        %v1810 = vsel %vm237, %v1809, %v1628
        %v1811 = vrot.slane %v1628, 4
        %v1812 = vsel %vm237, %v1654, %v1811
        %v1814 = vunpack.c.l.s4 1983009808
        %v1815 = vunpack.c.0.s8 %v1814
        %v1816 = vperm.slane %v1810, %v1815
        %v1818 = vunpack.c.l.s4 1983009808
        %v1819 = vunpack.c.0.s8 %v1818
        %v1820 = vperm.slane %v1812, %v1819
        %v1821 = vrot.slane %v1792, 4
        %v1822 = vsel %vm237, %v1821, %v1780
        %v1823 = vrot.slane %v1780, 4
        %v1824 = vsel %vm237, %v1792, %v1823
        %v1826 = vunpack.c.l.s4 1934713408
        %v1827 = vunpack.c.0.s8 %v1826
        %v1828 = vperm.slane %v1822, %v1827
        %v1830 = vunpack.c.l.s4 1934713408
        %v1831 = vunpack.c.0.s8 %v1830
        %v1832 = vperm.slane %v1824, %v1831
        %v1833 = vrot.slane %v1796, 4
        %v1834 = vsel %vm237, %v1833, %v1784
        %v1835 = vrot.slane %v1784, 4
        %v1836 = vsel %vm237, %v1796, %v1835
        %v1838 = vunpack.c.l.s4 1934713408
        %v1839 = vunpack.c.0.s8 %v1838
        %v1840 = vperm.slane %v1834, %v1839
        %v1842 = vunpack.c.l.s4 1934713408
        %v1843 = vunpack.c.0.s8 %v1842
        %v1844 = vperm.slane %v1836, %v1843
        %v1845 = vrot.slane %v1816, 4
        %v1846 = vsel %vm237, %v1845, %v1804
        %v1847 = vrot.slane %v1804, 4
        %v1848 = vsel %vm237, %v1816, %v1847
        %v1850 = vunpack.c.l.s4 1934713408
        %v1851 = vunpack.c.0.s8 %v1850
        %v1852 = vperm.slane %v1846, %v1851
        %v1854 = vunpack.c.l.s4 1934713408
        %v1855 = vunpack.c.0.s8 %v1854
        %v1856 = vperm.slane %v1848, %v1855
        %v1857 = vrot.slane %v1820, 4
        %v1858 = vsel %vm237, %v1857, %v1808
        %v1859 = vrot.slane %v1808, 4
        %v1860 = vsel %vm237, %v1820, %v1859
        %v1862 = vunpack.c.l.s4 1934713408
        %v1863 = vunpack.c.0.s8 %v1862
        %v1864 = vperm.slane %v1858, %v1863
        %v1866 = vunpack.c.l.s4 1934713408
        %v1867 = vunpack.c.0.s8 %v1866
        %v1868 = vperm.slane %v1860, %v1867
        %v1869 = vrot.slane %v1852, 4
        %v1870 = vsel %vm237, %v1869, %v1828
        %v1871 = vrot.slane %v1828, 4
        %v1872 = vsel %vm237, %v1852, %v1871
        %v1873 = vrot.slane %v1856, 4
        %v1874 = vsel %vm237, %v1873, %v1832
        %v1875 = vrot.slane %v1832, 4
        %v1876 = vsel %vm237, %v1856, %v1875
        %v1877 = vrot.slane %v1864, 4
        %v1878 = vsel %vm237, %v1877, %v1840
        %v1879 = vrot.slane %v1840, 4
        %v1880 = vsel %vm237, %v1864, %v1879
        %v1881 = vrot.slane %v1868, 4
        %v1882 = vsel %vm237, %v1881, %v1844
        %v1883 = vrot.slane %v1844, 4
        %v1884 = vsel %vm237, %v1868, %v1883
        %v1885 = vrot.slane %v1491, 4
        %v1886 = vsel %vm237, %v1885, %v1465
        %v1887 = vrot.slane %v1465, 4
        %v1888 = vsel %vm237, %v1491, %v1887
        %v1890 = vunpack.c.l.s4 1983009808
        %v1891 = vunpack.c.0.s8 %v1890
        %v1892 = vperm.slane %v1886, %v1891
        %v1894 = vunpack.c.l.s4 1983009808
        %v1895 = vunpack.c.0.s8 %v1894
        %v1896 = vperm.slane %v1888, %v1895
        %v1897 = vrot.slane %v1504, 4
        %v1898 = vsel %vm237, %v1897, %v1478
        %v1899 = vrot.slane %v1478, 4
        %v1900 = vsel %vm237, %v1504, %v1899
        %v1902 = vunpack.c.l.s4 1983009808
        %v1903 = vunpack.c.0.s8 %v1902
        %v1904 = vperm.slane %v1898, %v1903
        %v1906 = vunpack.c.l.s4 1983009808
        %v1907 = vunpack.c.0.s8 %v1906
        %v1908 = vperm.slane %v1900, %v1907
        %v1909 = vrot.slane %v1543, 4
        %v1910 = vsel %vm237, %v1909, %v1517
        %v1911 = vrot.slane %v1517, 4
        %v1912 = vsel %vm237, %v1543, %v1911
        %v1914 = vunpack.c.l.s4 1983009808
        %v1915 = vunpack.c.0.s8 %v1914
        %v1916 = vperm.slane %v1910, %v1915
        %v1918 = vunpack.c.l.s4 1983009808
        %v1919 = vunpack.c.0.s8 %v1918
        %v1920 = vperm.slane %v1912, %v1919
        %v1921 = vrot.slane %v1556, 4
        %v1922 = vsel %vm237, %v1921, %v1530
        %v1923 = vrot.slane %v1530, 4
        %v1924 = vsel %vm237, %v1556, %v1923
        %v1926 = vunpack.c.l.s4 1983009808
        %v1927 = vunpack.c.0.s8 %v1926
        %v1928 = vperm.slane %v1922, %v1927
        %v1930 = vunpack.c.l.s4 1983009808
        %v1931 = vunpack.c.0.s8 %v1930
        %v1932 = vperm.slane %v1924, %v1931
        %v1933 = vrot.slane %v1904, 4
        %v1934 = vsel %vm237, %v1933, %v1892
        %v1935 = vrot.slane %v1892, 4
        %v1936 = vsel %vm237, %v1904, %v1935
        %v1938 = vunpack.c.l.s4 1934713408
        %v1939 = vunpack.c.0.s8 %v1938
        %v1940 = vperm.slane %v1934, %v1939
        %v1942 = vunpack.c.l.s4 1934713408
        %v1943 = vunpack.c.0.s8 %v1942
        %v1944 = vperm.slane %v1936, %v1943
        %v1945 = vrot.slane %v1908, 4
        %v1946 = vsel %vm237, %v1945, %v1896
        %v1947 = vrot.slane %v1896, 4
        %v1948 = vsel %vm237, %v1908, %v1947
        %v1950 = vunpack.c.l.s4 1934713408
        %v1951 = vunpack.c.0.s8 %v1950
        %v1952 = vperm.slane %v1946, %v1951
        %v1954 = vunpack.c.l.s4 1934713408
        %v1955 = vunpack.c.0.s8 %v1954
        %v1956 = vperm.slane %v1948, %v1955
        %v1957 = vrot.slane %v1928, 4
        %v1958 = vsel %vm237, %v1957, %v1916
        %v1959 = vrot.slane %v1916, 4
        %v1960 = vsel %vm237, %v1928, %v1959
        %v1962 = vunpack.c.l.s4 1934713408
        %v1963 = vunpack.c.0.s8 %v1962
        %v1964 = vperm.slane %v1958, %v1963
        %v1966 = vunpack.c.l.s4 1934713408
        %v1967 = vunpack.c.0.s8 %v1966
        %v1968 = vperm.slane %v1960, %v1967
        %v1969 = vrot.slane %v1932, 4
        %v1970 = vsel %vm237, %v1969, %v1920
        %v1971 = vrot.slane %v1920, 4
        %v1972 = vsel %vm237, %v1932, %v1971
        %v1974 = vunpack.c.l.s4 1934713408
        %v1975 = vunpack.c.0.s8 %v1974
        %v1976 = vperm.slane %v1970, %v1975
        %v1978 = vunpack.c.l.s4 1934713408
        %v1979 = vunpack.c.0.s8 %v1978
        %v1980 = vperm.slane %v1972, %v1979
        %v1981 = vrot.slane %v1964, 4
        %v1982 = vsel %vm237, %v1981, %v1940
        %v1983 = vrot.slane %v1940, 4
        %v1984 = vsel %vm237, %v1964, %v1983
        %v1985 = vrot.slane %v1968, 4
        %v1986 = vsel %vm237, %v1985, %v1944
        %v1987 = vrot.slane %v1944, 4
        %v1988 = vsel %vm237, %v1968, %v1987
        %v1989 = vrot.slane %v1976, 4
        %v1990 = vsel %vm237, %v1989, %v1952
        %v1991 = vrot.slane %v1952, 4
        %v1992 = vsel %vm237, %v1976, %v1991
        %v1993 = vrot.slane %v1980, 4
        %v1994 = vsel %vm237, %v1993, %v1956
        %v1995 = vrot.slane %v1956, 4
        %v1996 = vsel %vm237, %v1980, %v1995
        %v1997 = vrot.slane %v1595, 4
        %v1998 = vsel %vm237, %v1997, %v1569
        %v1999 = vrot.slane %v1569, 4
        %v2000 = vsel %vm237, %v1595, %v1999
        %v2002 = vunpack.c.l.s4 1983009808
        %v2003 = vunpack.c.0.s8 %v2002
        %v2004 = vperm.slane %v1998, %v2003
        %v2006 = vunpack.c.l.s4 1983009808
        %v2007 = vunpack.c.0.s8 %v2006
        %v2008 = vperm.slane %v2000, %v2007
        %v2009 = vrot.slane %v1608, 4
        %v2010 = vsel %vm237, %v2009, %v1582
        %v2011 = vrot.slane %v1582, 4
        %v2012 = vsel %vm237, %v1608, %v2011
        %v2014 = vunpack.c.l.s4 1983009808
        %v2015 = vunpack.c.0.s8 %v2014
        %v2016 = vperm.slane %v2010, %v2015
        %v2018 = vunpack.c.l.s4 1983009808
        %v2019 = vunpack.c.0.s8 %v2018
        %v2020 = vperm.slane %v2012, %v2019
        %v2021 = vrot.slane %v1647, 4
        %v2022 = vsel %vm237, %v2021, %v1621
        %v2023 = vrot.slane %v1621, 4
        %v2024 = vsel %vm237, %v1647, %v2023
        %v2026 = vunpack.c.l.s4 1983009808
        %v2027 = vunpack.c.0.s8 %v2026
        %v2028 = vperm.slane %v2022, %v2027
        %v2030 = vunpack.c.l.s4 1983009808
        %v2031 = vunpack.c.0.s8 %v2030
        %v2032 = vperm.slane %v2024, %v2031
        %v2033 = vrot.slane %v1660, 4
        %v2034 = vsel %vm237, %v2033, %v1634
        %v2035 = vrot.slane %v1634, 4
        %v2036 = vsel %vm237, %v1660, %v2035
        %v2038 = vunpack.c.l.s4 1983009808
        %v2039 = vunpack.c.0.s8 %v2038
        %v2040 = vperm.slane %v2034, %v2039
        %v2042 = vunpack.c.l.s4 1983009808
        %v2043 = vunpack.c.0.s8 %v2042
        %v2044 = vperm.slane %v2036, %v2043
        %v2045 = vrot.slane %v2016, 4
        %v2046 = vsel %vm237, %v2045, %v2004
        %v2047 = vrot.slane %v2004, 4
        %v2048 = vsel %vm237, %v2016, %v2047
        %v2050 = vunpack.c.l.s4 1934713408
        %v2051 = vunpack.c.0.s8 %v2050
        %v2052 = vperm.slane %v2046, %v2051
        %v2054 = vunpack.c.l.s4 1934713408
        %v2055 = vunpack.c.0.s8 %v2054
        %v2056 = vperm.slane %v2048, %v2055
        %v2057 = vrot.slane %v2020, 4
        %v2058 = vsel %vm237, %v2057, %v2008
        %v2059 = vrot.slane %v2008, 4
        %v2060 = vsel %vm237, %v2020, %v2059
        %v2062 = vunpack.c.l.s4 1934713408
        %v2063 = vunpack.c.0.s8 %v2062
        %v2064 = vperm.slane %v2058, %v2063
        %v2066 = vunpack.c.l.s4 1934713408
        %v2067 = vunpack.c.0.s8 %v2066
        %v2068 = vperm.slane %v2060, %v2067
        %v2069 = vrot.slane %v2040, 4
        %v2070 = vsel %vm237, %v2069, %v2028
        %v2071 = vrot.slane %v2028, 4
        %v2072 = vsel %vm237, %v2040, %v2071
        %v2074 = vunpack.c.l.s4 1934713408
        %v2075 = vunpack.c.0.s8 %v2074
        %v2076 = vperm.slane %v2070, %v2075
        %v2078 = vunpack.c.l.s4 1934713408
        %v2079 = vunpack.c.0.s8 %v2078
        %v2080 = vperm.slane %v2072, %v2079
        %v2081 = vrot.slane %v2044, 4
        %v2082 = vsel %vm237, %v2081, %v2032
        %v2083 = vrot.slane %v2032, 4
        %v2084 = vsel %vm237, %v2044, %v2083
        %v2086 = vunpack.c.l.s4 1934713408
        %v2087 = vunpack.c.0.s8 %v2086
        %v2088 = vperm.slane %v2082, %v2087
        %v2090 = vunpack.c.l.s4 1934713408
        %v2091 = vunpack.c.0.s8 %v2090
        %v2092 = vperm.slane %v2084, %v2091
        %v2093 = vrot.slane %v2076, 4
        %v2094 = vsel %vm237, %v2093, %v2052
        %v2095 = vrot.slane %v2052, 4
        %v2096 = vsel %vm237, %v2076, %v2095
        %v2097 = vrot.slane %v2080, 4
        %v2098 = vsel %vm237, %v2097, %v2056
        %v2099 = vrot.slane %v2056, 4
        %v2100 = vsel %vm237, %v2080, %v2099
        %v2101 = vrot.slane %v2088, 4
        %v2102 = vsel %vm237, %v2101, %v2064
        %v2103 = vrot.slane %v2064, 4
        %v2104 = vsel %vm237, %v2088, %v2103
        %v2105 = vrot.slane %v2092, 4
        %v2106 = vsel %vm237, %v2105, %v2068
        %v2107 = vrot.slane %v2068, 4
        %v2108 = vsel %vm237, %v2092, %v2107
        %2111 = vrot.lane.b32.xlu0 %v1760, 8
        %v2112 = vpop.permute.xlu0 %2111
        %2113 = vrot.lane.b32.xlu0 %v1872, 8
        %v2114 = vpop.permute.xlu0 %2113
        %2119 = vrot.lane.b32.xlu0 %v1762, 16
        %v2120 = vpop.permute.xlu0 %2119
        %2121 = vrot.lane.b32.xlu0 %v1874, 16
        %v2122 = vpop.permute.xlu0 %2121
        %2127 = vrot.lane.b32.xlu0 %v1764, 24
        %v2128 = vpop.permute.xlu0 %2127
        %2129 = vrot.lane.b32.xlu0 %v1876, 24
        %v2130 = vpop.permute.xlu0 %2129
        %2135 = vrot.lane.b32.xlu0 %v1766, 32
        %v2136 = vpop.permute.xlu0 %2135
        %2137 = vrot.lane.b32.xlu0 %v1878, 32
        %v2138 = vpop.permute.xlu0 %2137
        %2143 = vrot.lane.b32.xlu0 %v1768, 40
        %v2144 = vpop.permute.xlu0 %2143
        %2145 = vrot.lane.b32.xlu0 %v1880, 40
        %v2146 = vpop.permute.xlu0 %2145
        %2151 = vrot.lane.b32.xlu0 %v1770, 48
        %v2152 = vpop.permute.xlu0 %2151
        %2153 = vrot.lane.b32.xlu0 %v1882, 48
        %v2154 = vpop.permute.xlu0 %2153
        %2159 = vrot.lane.b32.xlu0 %v1772, 56
        %v2160 = vpop.permute.xlu0 %2159
        %2161 = vrot.lane.b32.xlu0 %v1884, 56
        %v2162 = vpop.permute.xlu0 %2161
        %2167 = vrot.lane.b32.xlu0 %v1982, 64
        %v2168 = vpop.permute.xlu0 %2167
        %2169 = vrot.lane.b32.xlu0 %v2094, 64
        %v2170 = vpop.permute.xlu0 %2169
        %2175 = vrot.lane.b32.xlu0 %v1984, 72
        %v2176 = vpop.permute.xlu0 %2175
        %2177 = vrot.lane.b32.xlu0 %v2096, 72
        %v2178 = vpop.permute.xlu0 %2177
        %2183 = vrot.lane.b32.xlu0 %v1986, 80
        %v2184 = vpop.permute.xlu0 %2183
        %2185 = vrot.lane.b32.xlu0 %v2098, 80
        %v2186 = vpop.permute.xlu0 %2185
        %2191 = vrot.lane.b32.xlu0 %v1988, 88
        %v2192 = vpop.permute.xlu0 %2191
        %2193 = vrot.lane.b32.xlu0 %v2100, 88
        %v2194 = vpop.permute.xlu0 %2193
        %2199 = vrot.lane.b32.xlu0 %v1990, 96
        %v2200 = vpop.permute.xlu0 %2199
        %2201 = vrot.lane.b32.xlu0 %v2102, 96
        %v2202 = vpop.permute.xlu0 %2201
        %2207 = vrot.lane.b32.xlu0 %v1992, 104
        %v2208 = vpop.permute.xlu0 %2207
        %2209 = vrot.lane.b32.xlu0 %v2104, 104
        %v2210 = vpop.permute.xlu0 %2209
        %2215 = vrot.lane.b32.xlu0 %v1994, 112
        %v2216 = vpop.permute.xlu0 %2215
        %2217 = vrot.lane.b32.xlu0 %v2106, 112
        %v2218 = vpop.permute.xlu0 %2217
        %2223 = vrot.lane.b32.xlu0 %v1996, 120
        %v2224 = vpop.permute.xlu0 %2223
        %2225 = vrot.lane.b32.xlu0 %v2108, 120
        %v2226 = vpop.permute.xlu0 %2225
        %v2229 = vsel %vm685, %v1758, %v2112
        %v2230 = vsel %vm685, %v1870, %v2114
        %vm2231 = vcmask 130048
        %v2232 = vsel %vm2231, %v2229, %v2120
        %v2233 = vsel %vm2231, %v2230, %v2122
        %vm2234 = vcmask 195584
        %v2235 = vsel %vm2234, %v2232, %v2128
        %v2236 = vsel %vm2234, %v2233, %v2130
        %vm2237 = vcmask 261120
        %v2238 = vsel %vm2237, %v2235, %v2136
        %v2239 = vsel %vm2237, %v2236, %v2138
        %vm2240 = vcmask 326656
        %v2241 = vsel %vm2240, %v2238, %v2144
        %v2242 = vsel %vm2240, %v2239, %v2146
        %v2243 = vsel %vm1312, %v2241, %v2152
        %v2244 = vsel %vm1312, %v2242, %v2154
        %vm2245 = vcmask 457728
        %v2246 = vsel %vm2245, %v2243, %v2160
        %v2247 = vsel %vm2245, %v2244, %v2162
        %vm2248 = vcmask 523264
        %v2249 = vsel %vm2248, %v2246, %v2168
        %v2250 = vsel %vm2248, %v2247, %v2170
        %vm2251 = vcmask 588800
        %v2252 = vsel %vm2251, %v2249, %v2176
        %v2253 = vsel %vm2251, %v2250, %v2178
        %vm2254 = vcmask 654336
        %v2255 = vsel %vm2254, %v2252, %v2184
        %v2256 = vsel %vm2254, %v2253, %v2186
        %v2257 = vsel %vm1300, %v2255, %v2192
        %v2258 = vsel %vm1300, %v2256, %v2194
        %vm2259 = vcmask 785408
        %v2260 = vsel %vm2259, %v2257, %v2200
        %v2261 = vsel %vm2259, %v2258, %v2202
        %vm2262 = vcmask 850944
        %v2263 = vsel %vm2262, %v2260, %v2208
        %v2264 = vsel %vm2262, %v2261, %v2210
        %vm2265 = vcmask 916480
        %v2266 = vsel %vm2265, %v2263, %v2216
        %v2267 = vsel %vm2265, %v2264, %v2218
        %vm2268 = vcmask 982016
        %v2269 = vsel %vm2268, %v2266, %v2224
        %v2270 = vsel %vm2268, %v2267, %v2226
        %v2271 = vmul.f32 %v142, %v2269
        %v2272 = vmul.f32 %v143, %v2270
        %2273 = vst [vmem:[%s136] sm:$0xff] %v2271
        %2274 = vst [vmem:[%s136 + $0x8] sm:$0xff] %v2272
        %s2275 = sand.u32 %s71, 1
        %s2276 = scalar_lea.sflag [#allocation3], %s2275
        %s2277 = sand.u32 %s71, 1
        %s2278 = smul.addr %s2277, 16
        %s2279 = scalar_lea.vmem [#allocation2], %s2278
        // Predicated region
        $region29: #{tpu_custom_call.1} parent=27 // pred_check
          %p2280 = pneg %p81
        $region30: #{tpu_custom_call.1} parent=27 // pred_check_branch
          %2282 = sbr.rel (%p2280) target = $region32
        $region31: #{tpu_custom_call.1} parent=27 // pred_region
          %2284 = vsyncadd %s2276, 0
          %s2285 = smul.addr %s16, 2
          %s2286 = smul.addr %s2285, 8
          %s2287 = scalar_lea.hbm %s2, %s2286
          %s2288 = sshll.u32 %s2279, 4
          %s2289 = int_to_ptr.vmem [resolvable:$true] %s2288
          %s2290 = sshll.u32 %s2287, 4
          %s2291 = int_to_ptr.hbm [resolvable:$true] %s2290
          %2296 = dma.vmem_to_hbm [thread:$0]  %s2289, 256, %s2291, %s2276, 128, 128, 8
        $region32: #{tpu_custom_call.1} parent=27 // pred_fallthru
          _
      $region28: #{tpu_custom_call.1} parent=5 // pred_fallthru
        _
      %p2297 = scmp.le.s32.totalorder 2, %s11
      // Predicated region
      $region33: #{tpu_custom_call.1} parent=5 // pred_check
        %p2298 = pneg %p2297
      $region34: #{tpu_custom_call.1} parent=5 // pred_check_branch
        %2300 = sbr.rel (%p2298) target = $region36
      $region35: #{tpu_custom_call.1} parent=5 // pred_region
        %s2301 = ssub.s32 %s11, 2
        // Predicated region
        $region37: #{tpu_custom_call.1} parent=35 // pred_check
          %p2302 = pneg %p87
        $region38: #{tpu_custom_call.1} parent=35 // pred_check_branch
          %2304 = sbr.rel (%p2302) target = $region40
        $region39: #{tpu_custom_call.1} parent=35 // pred_region
          %s2305 = sand.u32 %s72, 1
          %s2306 = scalar_lea.sflag [#allocation3], %s2305
          %s2307 = sand.u32 %s72, 1
          %s2308 = smul.addr %s2307, 16
          %s2309 = scalar_lea.vmem [#allocation2], %s2308
          %2311 = dma.done %s2306, 256
        $region40: #{tpu_custom_call.1} parent=35 // pred_fallthru
          _
      $region36: #{tpu_custom_call.1} parent=5 // pred_fallthru
        _
    $region6: #{tpu_custom_call.1} parent=1 // loop_footer
      %s15 = sadd.s32 1, %s11
    $region7: #{tpu_custom_call.1} parent=1 // loop_footer_branch
      %10 = sbr.rel target = $region3
    $region8: #{tpu_custom_call.1} parent=1 // loop_exit
      _
    %2312 = vsyncpa [#allocation3], 1
    %s2313 = scalar_lea.sflag [#allocation3], 1
    %2314 = vsyncpa %s2313, 1

</llo_original>
